<compile_context>
chip_gen: v7x
topology: tpu7x:2x2x1
jax: 0.10.0
libtpu: 0.0.40
codegen_flags: <defaults>
</compile_context>

<pallas_src>
import functools

import jax
import jax.numpy as jnp
from jax.experimental import pallas as pl
from jax.experimental.pallas import tpu as pltpu


def _layernorm(y, g, b, eps=1e-5):
    mu = jnp.mean(y, axis=-1, keepdims=True)
    var = jnp.mean((y - mu) ** 2, axis=-1, keepdims=True)
    return (y - mu) * jax.lax.rsqrt(var + eps) * g + b


def decoder_block_kernel(T, H,
                         x_ref, wk_ref, wv_ref, wo_ref, bo_ref,
                         g1_ref, b1n_ref,
                         w1_ref, b1_ref, w2_ref, b2_ref,
                         g2_ref, b2n_ref,
                         o_ref):
    # x block: (M, E) with M = bt * T (batch folded into matmul rows).
    x = x_ref[...]                                       # f32 (M, E)
    M, E = x.shape
    bt = M // T
    hs = E // H
    xb = x.astype(jnp.bfloat16)

    # Fused full-width projections (q == k in the reference module).
    # sqrt(head_size ** -5) is pre-folded into wk in the wrapper.
    k_all = jnp.dot(xb, wk_ref[...],
                    preferred_element_type=jnp.float32).astype(jnp.bfloat16)
    v_all = jnp.dot(xb, wv_ref[...],
                    preferred_element_type=jnp.float32).astype(jnp.bfloat16)
    k3 = k_all.reshape(bt, T, E)                         # (bt, T, E) bf16
    v3 = v_all.reshape(bt, T, E)

    # Tiny (T, T) causal mask — no cross-batch (M, M) scores any more.
    row = jax.lax.broadcasted_iota(jnp.int32, (T, T), 0)
    col = jax.lax.broadcasted_iota(jnp.int32, (T, T), 1)
    mask = col <= row
    neg_big = jnp.float32(-1e30)                         # finite; NaN-safe vs -inf

    heads_out = []
    for h in range(H):                                   # small static head loop
        kh = k3[:, :, h * hs:(h + 1) * hs]               # (bt, T, hs)
        vh = v3[:, :, h * hs:(h + 1) * hs]               # (bt, T, hs)
        # q == k; per-batch scores, f32 accumulation.
        wei = jnp.einsum('btd,bsd->bts', kh, kh,
                         preferred_element_type=jnp.float32)   # (bt, T, T)
        wei = jnp.where(mask, wei, neg_big)
        m = jnp.max(wei, axis=-1, keepdims=True)
        e = jnp.exp(wei - m)
        p = e * pl.reciprocal(jnp.sum(e, axis=-1, keepdims=True), approx=True)
        # dropout on attention probs: identity (eval)
        oh = jnp.einsum('bts,bsd->btd', p.astype(jnp.bfloat16), vh,
                        preferred_element_type=jnp.float32)    # (bt, T, hs)
        heads_out.append(oh)

    # Concatenate heads along lanes, then ONE K=E output projection.
    cat = jnp.concatenate(heads_out, axis=-1).reshape(M, E)    # (M, E) f32
    attn = jnp.dot(cat.astype(jnp.bfloat16), wo_ref[...],
                   preferred_element_type=jnp.float32) + bo_ref[...]
    # dropout on projection: identity (eval)

    norm = _layernorm(attn + x, g1_ref[...], b1n_ref[...])

    ff = jnp.dot(norm.astype(jnp.bfloat16), w1_ref[...],
                 preferred_element_type=jnp.float32) + b1_ref[...]
    ff = jnp.maximum(ff, 0.0)
    ff = jnp.dot(ff.astype(jnp.bfloat16), w2_ref[...],
                 preferred_element_type=jnp.float32) + b2_ref[...]
    # dropout in feed-forward: identity (eval)

    out = _layernorm(ff + norm + x, g2_ref[...], b2n_ref[...])
    o_ref[...] = out.astype(o_ref.dtype)


def decoder_block(x, params):
    """x: (B, T, E) float32. params: dict of weights (see init_params)."""
    B, T, E = x.shape
    wk, wv = params["wk"], params["wv"]
    H, _, hs = wk.shape
    scale = float(hs) ** (-5)          # faithful: head_size ** (-5)

    # Weight prep (not per-call input prescaling): stack per-head weights to
    # (E, E) matching the torch.cat head order, fold sqrt(scale) into Wk
    # (q == k so Wk*s reproduces wei*scale), and cast matmul weights to bf16.
    wk_all = (jnp.transpose(wk, (1, 0, 2)).reshape(E, H * hs)
              * (scale ** 0.5)).astype(jnp.bfloat16)
    wv_all = jnp.transpose(wv, (1, 0, 2)).reshape(E, H * hs).astype(jnp.bfloat16)
    wo = params["wo"].astype(jnp.bfloat16)
    w1 = params["w1"].astype(jnp.bfloat16)
    w2 = params["w2"].astype(jnp.bfloat16)

    # Fold batch into rows. Target ~512 rows/step (amortizes per-step
    # overhead), but keep >= 2 grid steps when B >= 2 so the "parallel" axis
    # can shard across v7x's two TensorCores.
    target_rows = 512
    bt = min(B, max(1, target_rows // T))
    while B % bt != 0:
        bt -= 1
    if B // bt < 2 and B >= 2:
        bt = max(1, bt // 2)
        while B % bt != 0:
            bt -= 1
    if (bt * T) % 8 != 0:              # (8,128) sublane rule fallback
        bt = B
    rows = bt * T
    grid = (B // bt,)
    x2d = x.reshape(B * T, E)

    const = lambda shape: pl.BlockSpec(shape, lambda i: (0,) * len(shape))
    in_specs = [
        pl.BlockSpec((rows, E), lambda i: (i, 0)),   # x rows (batch folded into M)
        const((E, E)), const((E, E)),                # stacked key / value weights (bf16)
        const((E, E)), const((1, E)),                # out-proj W (bf16), b (f32)
        const((1, E)), const((1, E)),                # layer_norm_attn gamma, beta
        const((E, E)), const((1, E)),                # ffn linear1 W (bf16), b
        const((E, E)), const((1, E)),                # ffn linear2 W (bf16), b
        const((1, E)), const((1, E)),                # layer_norm_ffn gamma, beta
    ]
    out_spec = pl.BlockSpec((rows, E), lambda i: (i, 0))

    out2d = pl.pallas_call(
        functools.partial(decoder_block_kernel, T, H),
        out_shape=jax.ShapeDtypeStruct((B * T, E), x.dtype),
        grid_spec=pltpu.PrefetchScalarGridSpec(
            num_scalar_prefetch=0,
            grid=grid,
            in_specs=in_specs,
            out_specs=out_spec,
        ),
        compiler_params=pltpu.CompilerParams(
            dimension_semantics=("parallel",),
            vmem_limit_bytes=32 * 1024 * 1024,   # above v5e's 16 MiB default; safe on v7x
        ),
    )(x2d, wk_all, wv_all, wo, params["bo"],
      params["ln1_g"], params["ln1_b"],
      w1, params["b1"], w2, params["b2"],
      params["ln2_g"], params["ln2_b"])
    return out2d.reshape(B, T, E)


def init_params(key, embedding_size, no_of_heads):
    E, H = embedding_size, no_of_heads
    hs = E // H
    ks = jax.random.split(key, 8)
    s = 0.1
    return {
        "wk": jax.random.normal(ks[0], (H, E, hs), jnp.float32) * s,
        "wv": jax.random.normal(ks[1], (H, E, hs), jnp.float32) * s,
        "wo": jax.random.normal(ks[2], (E, E), jnp.float32) * s,
        "bo": jax.random.normal(ks[3], (1, E), jnp.float32) * s,
        "ln1_g": jnp.ones((1, E), jnp.float32),
        "ln1_b": jnp.zeros((1, E), jnp.float32),
        "w1": jax.random.normal(ks[4], (E, E), jnp.float32) * s,
        "b1": jax.random.normal(ks[5], (1, E), jnp.float32) * s,
        "w2": jax.random.normal(ks[6], (E, E), jnp.float32) * s,
        "b2": jax.random.normal(ks[7], (1, E), jnp.float32) * s,
        "ln2_g": jnp.ones((1, E), jnp.float32),
        "ln2_b": jnp.zeros((1, E), jnp.float32),
    }


def decoder_block_ref(x, params):
    """Pure-JAX f32 reference mirroring the PyTorch forward (eval mode)."""
    B, T, E = x.shape
    wk, wv = params["wk"], params["wv"]
    H, _, hs = wk.shape
    scale = float(hs) ** (-5)
    tril = jnp.tril(jnp.ones((T, T), jnp.float32))

    outs = []
    for h in range(H):
        k = x @ wk[h]                       # q == k
        v = x @ wv[h]
        wei = (k @ jnp.swapaxes(k, -2, -1)) * scale
        wei = jnp.where(tril == 0, -jnp.inf, wei)
        wei = jax.nn.softmax(wei, axis=-1)
        outs.append(wei @ v)
    cat = jnp.concatenate(outs, axis=-1)
    attn = cat @ params["wo"] + params["bo"][0]
    norm = _layernorm(attn + x, params["ln1_g"][0], params["ln1_b"][0])
    ff = jnp.maximum(norm @ params["w1"] + params["b1"][0], 0.0)
    ff = ff @ params["w2"] + params["b2"][0]
    return _layernorm(ff + norm + x, params["ln2_g"][0], params["ln2_b"][0])


if __name__ == "__main__":
    B, T, E, H = 2, 8, 32, 4          # batch, block_size, embedding_size, heads
    key = jax.random.PRNGKey(0)
    kx, kp = jax.random.split(key)
    x = jax.random.normal(kx, (B, T, E), jnp.float32)
    params = init_params(kp, E, H)

    out = decoder_block(x, params)
    out = jax.block_until_ready(out)

    ref = decoder_block_ref(x, params)
    assert out.shape == (B, T, E)
    # Tolerance loosened vs the f32 reference: matmul operands are bf16
    # (f32 accumulation) and the softmax denominator uses the approximate
    # EUP reciprocal (pl.reciprocal(..., approx=True)).
    assert jnp.allclose(out, ref, rtol=3e-2, atol=3e-2), "mismatch vs JAX reference"
    print("KERNEL_OK")
</pallas_src>

<mosaic_0001>
module attributes {stable_mosaic.version = 11 : i64} {
  func.func @decoder_block_kernel(%arg0: i32, %arg1: memref<8x32xf32, #tpu.memory_space<vmem>>, %arg2: memref<32x32xbf16, #tpu.memory_space<vmem>>, %arg3: memref<32x32xbf16, #tpu.memory_space<vmem>>, %arg4: memref<32x32xbf16, #tpu.memory_space<vmem>>, %arg5: memref<1x32xf32, #tpu.memory_space<vmem>>, %arg6: memref<1x32xf32, #tpu.memory_space<vmem>>, %arg7: memref<1x32xf32, #tpu.memory_space<vmem>>, %arg8: memref<32x32xbf16, #tpu.memory_space<vmem>>, %arg9: memref<1x32xf32, #tpu.memory_space<vmem>>, %arg10: memref<32x32xbf16, #tpu.memory_space<vmem>>, %arg11: memref<1x32xf32, #tpu.memory_space<vmem>>, %arg12: memref<1x32xf32, #tpu.memory_space<vmem>>, %arg13: memref<1x32xf32, #tpu.memory_space<vmem>>, %arg14: memref<8x32xf32, #tpu.memory_space<vmem>>) attributes {dimension_semantics = [#tpu.dimension_semantics<parallel>], iteration_bounds = array<i64: 2>, scalar_prefetch = 0 : i64, scratch_operands = 0 : i64, tpu.core_type = #tpu.core_type<tc>, window_params = [{transform_indices = @transform_0, window_bounds = array<i64: 8, 32>}, {pipeline_mode = #tpu.pipeline_mode<synchronous>, transform_indices = @transform_1, window_bounds = array<i64: 32, 32>}, {pipeline_mode = #tpu.pipeline_mode<synchronous>, transform_indices = @transform_2, window_bounds = array<i64: 32, 32>}, {pipeline_mode = #tpu.pipeline_mode<synchronous>, transform_indices = @transform_3, window_bounds = array<i64: 32, 32>}, {pipeline_mode = #tpu.pipeline_mode<synchronous>, transform_indices = @transform_4, window_bounds = array<i64: 1, 32>}, {pipeline_mode = #tpu.pipeline_mode<synchronous>, transform_indices = @transform_5, window_bounds = array<i64: 1, 32>}, {pipeline_mode = #tpu.pipeline_mode<synchronous>, transform_indices = @transform_6, window_bounds = array<i64: 1, 32>}, {pipeline_mode = #tpu.pipeline_mode<synchronous>, transform_indices = @transform_7, window_bounds = array<i64: 32, 32>}, {pipeline_mode = #tpu.pipeline_mode<synchronous>, transform_indices = @transform_8, window_bounds = array<i64: 1, 32>}, {pipeline_mode = #tpu.pipeline_mode<synchronous>, transform_indices = @transform_9, window_bounds = array<i64: 32, 32>}, {pipeline_mode = #tpu.pipeline_mode<synchronous>, transform_indices = @transform_10, window_bounds = array<i64: 1, 32>}, {pipeline_mode = #tpu.pipeline_mode<synchronous>, transform_indices = @transform_11, window_bounds = array<i64: 1, 32>}, {pipeline_mode = #tpu.pipeline_mode<synchronous>, transform_indices = @transform_12, window_bounds = array<i64: 1, 32>}, {transform_indices = @transform_13, window_bounds = array<i64: 8, 32>}]} {
    %c0 = arith.constant 0 : index
    %c0_0 = arith.constant 0 : index
    %0 = vector.load %arg1[%c0, %c0_0] : memref<8x32xf32, #tpu.memory_space<vmem>>, vector<8x32xf32>
    %1 = arith.truncf %0 : vector<8x32xf32> to vector<8x32xbf16>
    %c0_1 = arith.constant 0 : index
    %c0_2 = arith.constant 0 : index
    %2 = vector.load %arg2[%c0_1, %c0_2] : memref<32x32xbf16, #tpu.memory_space<vmem>>, vector<32x32xbf16>
    %cst = arith.constant dense<0.000000e+00> : vector<8x32xf32>
    %3 = tpu.matmul %1, %2, %cst {dimension_numbers = #tpu.dot_dimension_numbers<[1], [0], [0], [1], [0, 0, 1, 1], [], []>} : vector<8x32xbf16>, vector<32x32xbf16>, vector<8x32xf32> -> vector<8x32xf32>
    %4 = arith.truncf %3 : vector<8x32xf32> to vector<8x32xbf16>
    %c0_3 = arith.constant 0 : index
    %c0_4 = arith.constant 0 : index
    %5 = vector.load %arg3[%c0_3, %c0_4] : memref<32x32xbf16, #tpu.memory_space<vmem>>, vector<32x32xbf16>
    %cst_5 = arith.constant dense<0.000000e+00> : vector<8x32xf32>
    %6 = tpu.matmul %1, %5, %cst_5 {dimension_numbers = #tpu.dot_dimension_numbers<[1], [0], [0], [1], [0, 0, 1, 1], [], []>} : vector<8x32xbf16>, vector<32x32xbf16>, vector<8x32xf32> -> vector<8x32xf32>
    %7 = arith.truncf %6 : vector<8x32xf32> to vector<8x32xbf16>
    %8 = vector.shape_cast %4 : vector<8x32xbf16> to vector<1x8x32xbf16>
    %9 = vector.shape_cast %7 : vector<8x32xbf16> to vector<1x8x32xbf16>
    %10 = tpu.iota {dimensions = array<i32: 0>} : vector<8x8xi32>
    %11 = tpu.iota {dimensions = array<i32: 1>} : vector<8x8xi32>
    %12 = arith.cmpi sle, %11, %10 : vector<8x8xi32>
    %13 = vector.extract_strided_slice %8 {offsets = [0, 0, 0], sizes = [1, 8, 8], strides = [1, 1, 1]} : vector<1x8x32xbf16> to vector<1x8x8xbf16>
    %14 = vector.extract_strided_slice %9 {offsets = [0, 0, 0], sizes = [1, 8, 8], strides = [1, 1, 1]} : vector<1x8x32xbf16> to vector<1x8x8xbf16>
    "tpu.trace_start"() <{level = 10 : i32, message = "btd,bsd->bts"}> : () -> ()
    %cst_6 = arith.constant dense<0.000000e+00> : vector<1x8x8xf32>
    %15 = tpu.matmul %13, %13, %cst_6 {dimension_numbers = #tpu.dot_dimension_numbers<[2], [2], [1], [1], [0, 0, 0, 1, 1, 1], [0], [0]>} : vector<1x8x8xbf16>, vector<1x8x8xbf16>, vector<1x8x8xf32> -> vector<1x8x8xf32>
    %cst_7 = arith.constant -1.000000e+30 : f32
    "tpu.trace_stop"() : () -> ()
    %16 = vector.shape_cast %12 : vector<8x8xi1> to vector<1x8x8xi1>
    %17 = vector.broadcast %cst_7 : f32 to vector<1x8x8xf32>
    %18 = arith.select %16, %15, %17 : vector<1x8x8xi1>, vector<1x8x8xf32>
    %cst_8 = arith.constant dense<0xFF800000> : vector<1x8xf32>
    %19 = vector.multi_reduction <maximumf>, %18, %cst_8 [2] : vector<1x8x8xf32> to vector<1x8xf32>
    %20 = vector.shape_cast %19 : vector<1x8xf32> to vector<1x8x1xf32>
    %21 = vector.broadcast %20 : vector<1x8x1xf32> to vector<1x8x8xf32>
    %22 = arith.subf %18, %21 : vector<1x8x8xf32>
    %23 = math.exp %22 : vector<1x8x8xf32>
    %cst_9 = arith.constant dense<0.000000e+00> : vector<1x8xf32>
    %24 = vector.multi_reduction <add>, %23, %cst_9 [2] : vector<1x8x8xf32> to vector<1x8xf32>
    %25 = vector.shape_cast %24 : vector<1x8xf32> to vector<1x8x1xf32>
    %26 = tpu.reciprocal %25 {approx = true} : vector<1x8x1xf32> -> vector<1x8x1xf32>
    %27 = vector.broadcast %26 : vector<1x8x1xf32> to vector<1x8x8xf32>
    %28 = arith.mulf %23, %27 : vector<1x8x8xf32>
    %29 = arith.truncf %28 : vector<1x8x8xf32> to vector<1x8x8xbf16>
    "tpu.trace_start"() <{level = 10 : i32, message = "bts,bsd->btd"}> : () -> ()
    %cst_10 = arith.constant dense<0.000000e+00> : vector<1x8x8xf32>
    %30 = tpu.matmul %29, %14, %cst_10 {dimension_numbers = #tpu.dot_dimension_numbers<[2], [1], [1], [2], [0, 0, 0, 1, 1, 2], [0], [0]>} : vector<1x8x8xbf16>, vector<1x8x8xbf16>, vector<1x8x8xf32> -> vector<1x8x8xf32>
    "tpu.trace_stop"() : () -> ()
    %31 = vector.extract_strided_slice %8 {offsets = [0, 0, 8], sizes = [1, 8, 8], strides = [1, 1, 1]} : vector<1x8x32xbf16> to vector<1x8x8xbf16>
    %32 = vector.extract_strided_slice %9 {offsets = [0, 0, 8], sizes = [1, 8, 8], strides = [1, 1, 1]} : vector<1x8x32xbf16> to vector<1x8x8xbf16>
    "tpu.trace_start"() <{level = 10 : i32, message = "btd,bsd->bts"}> : () -> ()
    %cst_11 = arith.constant dense<0.000000e+00> : vector<1x8x8xf32>
    %33 = tpu.matmul %31, %31, %cst_11 {dimension_numbers = #tpu.dot_dimension_numbers<[2], [2], [1], [1], [0, 0, 0, 1, 1, 1], [0], [0]>} : vector<1x8x8xbf16>, vector<1x8x8xbf16>, vector<1x8x8xf32> -> vector<1x8x8xf32>
    %cst_12 = arith.constant -1.000000e+30 : f32
    "tpu.trace_stop"() : () -> ()
    %34 = vector.shape_cast %12 : vector<8x8xi1> to vector<1x8x8xi1>
    %35 = vector.broadcast %cst_12 : f32 to vector<1x8x8xf32>
    %36 = arith.select %34, %33, %35 : vector<1x8x8xi1>, vector<1x8x8xf32>
    %cst_13 = arith.constant dense<0xFF800000> : vector<1x8xf32>
    %37 = vector.multi_reduction <maximumf>, %36, %cst_13 [2] : vector<1x8x8xf32> to vector<1x8xf32>
    %38 = vector.shape_cast %37 : vector<1x8xf32> to vector<1x8x1xf32>
    %39 = vector.broadcast %38 : vector<1x8x1xf32> to vector<1x8x8xf32>
    %40 = arith.subf %36, %39 : vector<1x8x8xf32>
    %41 = math.exp %40 : vector<1x8x8xf32>
    %cst_14 = arith.constant dense<0.000000e+00> : vector<1x8xf32>
    %42 = vector.multi_reduction <add>, %41, %cst_14 [2] : vector<1x8x8xf32> to vector<1x8xf32>
    %43 = vector.shape_cast %42 : vector<1x8xf32> to vector<1x8x1xf32>
    %44 = tpu.reciprocal %43 {approx = true} : vector<1x8x1xf32> -> vector<1x8x1xf32>
    %45 = vector.broadcast %44 : vector<1x8x1xf32> to vector<1x8x8xf32>
    %46 = arith.mulf %41, %45 : vector<1x8x8xf32>
    %47 = arith.truncf %46 : vector<1x8x8xf32> to vector<1x8x8xbf16>
    "tpu.trace_start"() <{level = 10 : i32, message = "bts,bsd->btd"}> : () -> ()
    %cst_15 = arith.constant dense<0.000000e+00> : vector<1x8x8xf32>
    %48 = tpu.matmul %47, %32, %cst_15 {dimension_numbers = #tpu.dot_dimension_numbers<[2], [1], [1], [2], [0, 0, 0, 1, 1, 2], [0], [0]>} : vector<1x8x8xbf16>, vector<1x8x8xbf16>, vector<1x8x8xf32> -> vector<1x8x8xf32>
    "tpu.trace_stop"() : () -> ()
    %49 = vector.extract_strided_slice %8 {offsets = [0, 0, 16], sizes = [1, 8, 8], strides = [1, 1, 1]} : vector<1x8x32xbf16> to vector<1x8x8xbf16>
    %50 = vector.extract_strided_slice %9 {offsets = [0, 0, 16], sizes = [1, 8, 8], strides = [1, 1, 1]} : vector<1x8x32xbf16> to vector<1x8x8xbf16>
    "tpu.trace_start"() <{level = 10 : i32, message = "btd,bsd->bts"}> : () -> ()
    %cst_16 = arith.constant dense<0.000000e+00> : vector<1x8x8xf32>
    %51 = tpu.matmul %49, %49, %cst_16 {dimension_numbers = #tpu.dot_dimension_numbers<[2], [2], [1], [1], [0, 0, 0, 1, 1, 1], [0], [0]>} : vector<1x8x8xbf16>, vector<1x8x8xbf16>, vector<1x8x8xf32> -> vector<1x8x8xf32>
    %cst_17 = arith.constant -1.000000e+30 : f32
    "tpu.trace_stop"() : () -> ()
    %52 = vector.shape_cast %12 : vector<8x8xi1> to vector<1x8x8xi1>
    %53 = vector.broadcast %cst_17 : f32 to vector<1x8x8xf32>
    %54 = arith.select %52, %51, %53 : vector<1x8x8xi1>, vector<1x8x8xf32>
    %cst_18 = arith.constant dense<0xFF800000> : vector<1x8xf32>
    %55 = vector.multi_reduction <maximumf>, %54, %cst_18 [2] : vector<1x8x8xf32> to vector<1x8xf32>
    %56 = vector.shape_cast %55 : vector<1x8xf32> to vector<1x8x1xf32>
    %57 = vector.broadcast %56 : vector<1x8x1xf32> to vector<1x8x8xf32>
    %58 = arith.subf %54, %57 : vector<1x8x8xf32>
    %59 = math.exp %58 : vector<1x8x8xf32>
    %cst_19 = arith.constant dense<0.000000e+00> : vector<1x8xf32>
    %60 = vector.multi_reduction <add>, %59, %cst_19 [2] : vector<1x8x8xf32> to vector<1x8xf32>
    %61 = vector.shape_cast %60 : vector<1x8xf32> to vector<1x8x1xf32>
    %62 = tpu.reciprocal %61 {approx = true} : vector<1x8x1xf32> -> vector<1x8x1xf32>
    %63 = vector.broadcast %62 : vector<1x8x1xf32> to vector<1x8x8xf32>
    %64 = arith.mulf %59, %63 : vector<1x8x8xf32>
    %65 = arith.truncf %64 : vector<1x8x8xf32> to vector<1x8x8xbf16>
    "tpu.trace_start"() <{level = 10 : i32, message = "bts,bsd->btd"}> : () -> ()
    %cst_20 = arith.constant dense<0.000000e+00> : vector<1x8x8xf32>
    %66 = tpu.matmul %65, %50, %cst_20 {dimension_numbers = #tpu.dot_dimension_numbers<[2], [1], [1], [2], [0, 0, 0, 1, 1, 2], [0], [0]>} : vector<1x8x8xbf16>, vector<1x8x8xbf16>, vector<1x8x8xf32> -> vector<1x8x8xf32>
    "tpu.trace_stop"() : () -> ()
    %67 = vector.extract_strided_slice %8 {offsets = [0, 0, 24], sizes = [1, 8, 8], strides = [1, 1, 1]} : vector<1x8x32xbf16> to vector<1x8x8xbf16>
    %68 = vector.extract_strided_slice %9 {offsets = [0, 0, 24], sizes = [1, 8, 8], strides = [1, 1, 1]} : vector<1x8x32xbf16> to vector<1x8x8xbf16>
    "tpu.trace_start"() <{level = 10 : i32, message = "btd,bsd->bts"}> : () -> ()
    %cst_21 = arith.constant dense<0.000000e+00> : vector<1x8x8xf32>
    %69 = tpu.matmul %67, %67, %cst_21 {dimension_numbers = #tpu.dot_dimension_numbers<[2], [2], [1], [1], [0, 0, 0, 1, 1, 1], [0], [0]>} : vector<1x8x8xbf16>, vector<1x8x8xbf16>, vector<1x8x8xf32> -> vector<1x8x8xf32>
    %cst_22 = arith.constant -1.000000e+30 : f32
    "tpu.trace_stop"() : () -> ()
    %70 = vector.shape_cast %12 : vector<8x8xi1> to vector<1x8x8xi1>
    %71 = vector.broadcast %cst_22 : f32 to vector<1x8x8xf32>
    %72 = arith.select %70, %69, %71 : vector<1x8x8xi1>, vector<1x8x8xf32>
    %cst_23 = arith.constant dense<0xFF800000> : vector<1x8xf32>
    %73 = vector.multi_reduction <maximumf>, %72, %cst_23 [2] : vector<1x8x8xf32> to vector<1x8xf32>
    %74 = vector.shape_cast %73 : vector<1x8xf32> to vector<1x8x1xf32>
    %75 = vector.broadcast %74 : vector<1x8x1xf32> to vector<1x8x8xf32>
    %76 = arith.subf %72, %75 : vector<1x8x8xf32>
    %77 = math.exp %76 : vector<1x8x8xf32>
    %cst_24 = arith.constant dense<0.000000e+00> : vector<1x8xf32>
    %78 = vector.multi_reduction <add>, %77, %cst_24 [2] : vector<1x8x8xf32> to vector<1x8xf32>
    %79 = vector.shape_cast %78 : vector<1x8xf32> to vector<1x8x1xf32>
    %80 = tpu.reciprocal %79 {approx = true} : vector<1x8x1xf32> -> vector<1x8x1xf32>
    %81 = vector.broadcast %80 : vector<1x8x1xf32> to vector<1x8x8xf32>
    %82 = arith.mulf %77, %81 : vector<1x8x8xf32>
    %83 = arith.truncf %82 : vector<1x8x8xf32> to vector<1x8x8xbf16>
    "tpu.trace_start"() <{level = 10 : i32, message = "bts,bsd->btd"}> : () -> ()
    %cst_25 = arith.constant dense<0.000000e+00> : vector<1x8x8xf32>
    %84 = tpu.matmul %83, %68, %cst_25 {dimension_numbers = #tpu.dot_dimension_numbers<[2], [1], [1], [2], [0, 0, 0, 1, 1, 2], [0], [0]>} : vector<1x8x8xbf16>, vector<1x8x8xbf16>, vector<1x8x8xf32> -> vector<1x8x8xf32>
    "tpu.trace_stop"() : () -> ()
    %85 = tpu.concatenate %30, %48, %66, %84 in 2 : vector<1x8x8xf32>, vector<1x8x8xf32>, vector<1x8x8xf32>, vector<1x8x8xf32> -> vector<1x8x32xf32>
    %86 = vector.shape_cast %85 : vector<1x8x32xf32> to vector<8x32xf32>
    %87 = arith.truncf %86 : vector<8x32xf32> to vector<8x32xbf16>
    %c0_26 = arith.constant 0 : index
    %c0_27 = arith.constant 0 : index
    %88 = vector.load %arg4[%c0_26, %c0_27] : memref<32x32xbf16, #tpu.memory_space<vmem>>, vector<32x32xbf16>
    %cst_28 = arith.constant dense<0.000000e+00> : vector<8x32xf32>
    %89 = tpu.matmul %87, %88, %cst_28 {dimension_numbers = #tpu.dot_dimension_numbers<[1], [0], [0], [1], [0, 0, 1, 1], [], []>} : vector<8x32xbf16>, vector<32x32xbf16>, vector<8x32xf32> -> vector<8x32xf32>
    %c0_29 = arith.constant 0 : index
    %c0_30 = arith.constant 0 : index
    %90 = vector.load %arg5[%c0_29, %c0_30] : memref<1x32xf32, #tpu.memory_space<vmem>>, vector<1x32xf32>
    %91 = vector.broadcast %90 : vector<1x32xf32> to vector<8x32xf32>
    %92 = arith.addf %89, %91 : vector<8x32xf32>
    %93 = arith.addf %92, %0 : vector<8x32xf32>
    %c0_31 = arith.constant 0 : index
    %c0_32 = arith.constant 0 : index
    %94 = vector.load %arg6[%c0_31, %c0_32] : memref<1x32xf32, #tpu.memory_space<vmem>>, vector<1x32xf32>
    %c0_33 = arith.constant 0 : index
    %c0_34 = arith.constant 0 : index
    %95 = vector.load %arg7[%c0_33, %c0_34] : memref<1x32xf32, #tpu.memory_space<vmem>>, vector<1x32xf32>
    %cst_35 = arith.constant dense<0.000000e+00> : vector<8xf32>
    %96 = vector.multi_reduction <add>, %93, %cst_35 [1] : vector<8x32xf32> to vector<8xf32>
    %97 = vector.shape_cast %96 : vector<8xf32> to vector<8x1xf32>
    %cst_36 = arith.constant 3.200000e+01 : f32
    %98 = vector.broadcast %cst_36 : f32 to vector<8x1xf32>
    %99 = arith.divf %97, %98 : vector<8x1xf32>
    %100 = vector.broadcast %99 : vector<8x1xf32> to vector<8x32xf32>
    %101 = arith.subf %93, %100 : vector<8x32xf32>
    %102 = arith.mulf %101, %101 : vector<8x32xf32>
    %cst_37 = arith.constant dense<0.000000e+00> : vector<8xf32>
    %103 = vector.multi_reduction <add>, %102, %cst_37 [1] : vector<8x32xf32> to vector<8xf32>
    %104 = vector.shape_cast %103 : vector<8xf32> to vector<8x1xf32>
    %cst_38 = arith.constant 3.200000e+01 : f32
    %105 = vector.broadcast %cst_38 : f32 to vector<8x1xf32>
    %106 = arith.divf %104, %105 : vector<8x1xf32>
    %107 = vector.broadcast %99 : vector<8x1xf32> to vector<8x32xf32>
    %108 = arith.subf %93, %107 : vector<8x32xf32>
    %cst_39 = arith.constant 9.99999974E-6 : f32
    %109 = vector.broadcast %cst_39 : f32 to vector<8x1xf32>
    %110 = arith.addf %106, %109 : vector<8x1xf32>
    %111 = math.rsqrt %110 : vector<8x1xf32>
    %112 = vector.broadcast %111 : vector<8x1xf32> to vector<8x32xf32>
    %113 = arith.mulf %108, %112 : vector<8x32xf32>
    %114 = vector.broadcast %94 : vector<1x32xf32> to vector<8x32xf32>
    %115 = arith.mulf %113, %114 : vector<8x32xf32>
    %116 = vector.broadcast %95 : vector<1x32xf32> to vector<8x32xf32>
    %117 = arith.addf %115, %116 : vector<8x32xf32>
    %118 = arith.truncf %117 : vector<8x32xf32> to vector<8x32xbf16>
    %c0_40 = arith.constant 0 : index
    %c0_41 = arith.constant 0 : index
    %119 = vector.load %arg8[%c0_40, %c0_41] : memref<32x32xbf16, #tpu.memory_space<vmem>>, vector<32x32xbf16>
    %cst_42 = arith.constant dense<0.000000e+00> : vector<8x32xf32>
    %120 = tpu.matmul %118, %119, %cst_42 {dimension_numbers = #tpu.dot_dimension_numbers<[1], [0], [0], [1], [0, 0, 1, 1], [], []>} : vector<8x32xbf16>, vector<32x32xbf16>, vector<8x32xf32> -> vector<8x32xf32>
    %c0_43 = arith.constant 0 : index
    %c0_44 = arith.constant 0 : index
    %121 = vector.load %arg9[%c0_43, %c0_44] : memref<1x32xf32, #tpu.memory_space<vmem>>, vector<1x32xf32>
    %122 = vector.broadcast %121 : vector<1x32xf32> to vector<8x32xf32>
    %123 = arith.addf %120, %122 : vector<8x32xf32>
    %cst_45 = arith.constant 0.000000e+00 : f32
    %124 = vector.broadcast %cst_45 : f32 to vector<8x32xf32>
    %125 = arith.maximumf %123, %124 : vector<8x32xf32>
    %126 = arith.truncf %125 : vector<8x32xf32> to vector<8x32xbf16>
    %c0_46 = arith.constant 0 : index
    %c0_47 = arith.constant 0 : index
    %127 = vector.load %arg10[%c0_46, %c0_47] : memref<32x32xbf16, #tpu.memory_space<vmem>>, vector<32x32xbf16>
    %cst_48 = arith.constant dense<0.000000e+00> : vector<8x32xf32>
    %128 = tpu.matmul %126, %127, %cst_48 {dimension_numbers = #tpu.dot_dimension_numbers<[1], [0], [0], [1], [0, 0, 1, 1], [], []>} : vector<8x32xbf16>, vector<32x32xbf16>, vector<8x32xf32> -> vector<8x32xf32>
    %c0_49 = arith.constant 0 : index
    %c0_50 = arith.constant 0 : index
    %129 = vector.load %arg11[%c0_49, %c0_50] : memref<1x32xf32, #tpu.memory_space<vmem>>, vector<1x32xf32>
    %130 = vector.broadcast %129 : vector<1x32xf32> to vector<8x32xf32>
    %131 = arith.addf %128, %130 : vector<8x32xf32>
    %132 = arith.addf %131, %117 : vector<8x32xf32>
    %133 = arith.addf %132, %0 : vector<8x32xf32>
    %c0_51 = arith.constant 0 : index
    %c0_52 = arith.constant 0 : index
    %134 = vector.load %arg12[%c0_51, %c0_52] : memref<1x32xf32, #tpu.memory_space<vmem>>, vector<1x32xf32>
    %c0_53 = arith.constant 0 : index
    %c0_54 = arith.constant 0 : index
    %135 = vector.load %arg13[%c0_53, %c0_54] : memref<1x32xf32, #tpu.memory_space<vmem>>, vector<1x32xf32>
    %cst_55 = arith.constant dense<0.000000e+00> : vector<8xf32>
    %136 = vector.multi_reduction <add>, %133, %cst_55 [1] : vector<8x32xf32> to vector<8xf32>
    %137 = vector.shape_cast %136 : vector<8xf32> to vector<8x1xf32>
    %cst_56 = arith.constant 3.200000e+01 : f32
    %138 = vector.broadcast %cst_56 : f32 to vector<8x1xf32>
    %139 = arith.divf %137, %138 : vector<8x1xf32>
    %140 = vector.broadcast %139 : vector<8x1xf32> to vector<8x32xf32>
    %141 = arith.subf %133, %140 : vector<8x32xf32>
    %142 = arith.mulf %141, %141 : vector<8x32xf32>
    %cst_57 = arith.constant dense<0.000000e+00> : vector<8xf32>
    %143 = vector.multi_reduction <add>, %142, %cst_57 [1] : vector<8x32xf32> to vector<8xf32>
    %144 = vector.shape_cast %143 : vector<8xf32> to vector<8x1xf32>
    %cst_58 = arith.constant 3.200000e+01 : f32
    %145 = vector.broadcast %cst_58 : f32 to vector<8x1xf32>
    %146 = arith.divf %144, %145 : vector<8x1xf32>
    %147 = vector.broadcast %139 : vector<8x1xf32> to vector<8x32xf32>
    %148 = arith.subf %133, %147 : vector<8x32xf32>
    %cst_59 = arith.constant 9.99999974E-6 : f32
    %149 = vector.broadcast %cst_59 : f32 to vector<8x1xf32>
    %150 = arith.addf %146, %149 : vector<8x1xf32>
    %151 = math.rsqrt %150 : vector<8x1xf32>
    %152 = vector.broadcast %151 : vector<8x1xf32> to vector<8x32xf32>
    %153 = arith.mulf %148, %152 : vector<8x32xf32>
    %154 = vector.broadcast %134 : vector<1x32xf32> to vector<8x32xf32>
    %155 = arith.mulf %153, %154 : vector<8x32xf32>
    %156 = vector.broadcast %135 : vector<1x32xf32> to vector<8x32xf32>
    %157 = arith.addf %155, %156 : vector<8x32xf32>
    %c0_60 = arith.constant 0 : index
    %c0_61 = arith.constant 0 : index
    %158 = vector.load %arg14[%c0_60, %c0_61] : memref<8x32xf32, #tpu.memory_space<vmem>>, vector<8x32xf32>
    tpu.vector_store %arg14[%c0_60, %c0_61], %157 {strides = array<i32>} : memref<8x32xf32, #tpu.memory_space<vmem>>, vector<8x32xf32>,
    return
  }
  func.func @transform_0(%arg0: i32) -> (i32, i32) {
    %c0_i32 = arith.constant 0 : i32
    %c0_i32_0 = arith.constant 0 : i32
    return %arg0, %c0_i32 : i32, i32
  }
  func.func @transform_1(%arg0: i32) -> (i32, i32) {
    %c0_i32 = arith.constant 0 : i32
    %c0_i32_0 = arith.constant 0 : i32
    %c0_i32_1 = arith.constant 0 : i32
    return %c0_i32, %c0_i32_0 : i32, i32
  }
  func.func @transform_2(%arg0: i32) -> (i32, i32) {
    %c0_i32 = arith.constant 0 : i32
    %c0_i32_0 = arith.constant 0 : i32
    %c0_i32_1 = arith.constant 0 : i32
    return %c0_i32, %c0_i32_0 : i32, i32
  }
  func.func @transform_3(%arg0: i32) -> (i32, i32) {
    %c0_i32 = arith.constant 0 : i32
    %c0_i32_0 = arith.constant 0 : i32
    %c0_i32_1 = arith.constant 0 : i32
    return %c0_i32, %c0_i32_0 : i32, i32
  }
  func.func @transform_4(%arg0: i32) -> (i32, i32) {
    %c0_i32 = arith.constant 0 : i32
    %c0_i32_0 = arith.constant 0 : i32
    %c0_i32_1 = arith.constant 0 : i32
    return %c0_i32, %c0_i32_0 : i32, i32
  }
  func.func @transform_5(%arg0: i32) -> (i32, i32) {
    %c0_i32 = arith.constant 0 : i32
    %c0_i32_0 = arith.constant 0 : i32
    %c0_i32_1 = arith.constant 0 : i32
    return %c0_i32, %c0_i32_0 : i32, i32
  }
  func.func @transform_6(%arg0: i32) -> (i32, i32) {
    %c0_i32 = arith.constant 0 : i32
    %c0_i32_0 = arith.constant 0 : i32
    %c0_i32_1 = arith.constant 0 : i32
    return %c0_i32, %c0_i32_0 : i32, i32
  }
  func.func @transform_7(%arg0: i32) -> (i32, i32) {
    %c0_i32 = arith.constant 0 : i32
    %c0_i32_0 = arith.constant 0 : i32
    %c0_i32_1 = arith.constant 0 : i32
    return %c0_i32, %c0_i32_0 : i32, i32
  }
  func.func @transform_8(%arg0: i32) -> (i32, i32) {
    %c0_i32 = arith.constant 0 : i32
    %c0_i32_0 = arith.constant 0 : i32
    %c0_i32_1 = arith.constant 0 : i32
    return %c0_i32, %c0_i32_0 : i32, i32
  }
  func.func @transform_9(%arg0: i32) -> (i32, i32) {
    %c0_i32 = arith.constant 0 : i32
    %c0_i32_0 = arith.constant 0 : i32
    %c0_i32_1 = arith.constant 0 : i32
    return %c0_i32, %c0_i32_0 : i32, i32
  }
  func.func @transform_10(%arg0: i32) -> (i32, i32) {
    %c0_i32 = arith.constant 0 : i32
    %c0_i32_0 = arith.constant 0 : i32
    %c0_i32_1 = arith.constant 0 : i32
    return %c0_i32, %c0_i32_0 : i32, i32
  }
  func.func @transform_11(%arg0: i32) -> (i32, i32) {
    %c0_i32 = arith.constant 0 : i32
    %c0_i32_0 = arith.constant 0 : i32
    %c0_i32_1 = arith.constant 0 : i32
    return %c0_i32, %c0_i32_0 : i32, i32
  }
  func.func @transform_12(%arg0: i32) -> (i32, i32) {
    %c0_i32 = arith.constant 0 : i32
    %c0_i32_0 = arith.constant 0 : i32
    %c0_i32_1 = arith.constant 0 : i32
    return %c0_i32, %c0_i32_0 : i32, i32
  }
  func.func @transform_13(%arg0: i32) -> (i32, i32) {
    %c0_i32 = arith.constant 0 : i32
    %c0_i32_0 = arith.constant 0 : i32
    return %arg0, %c0_i32 : i32, i32
  }
}

</mosaic_0001>

<llo_original>
// kernel: tpu_custom_call.1
$region0: #{tpu_custom_call.1}
  #allocation0 [shape = 'u32[]', space=smem, size = 0x4, offset = 0x4, fixed_abs, tag = 'smem constant byte address 0x4 - core index']
  #allocation1 [shape = 'u32[144,128]{1,0:T(1,128)}', space=vmem, size = 0x12000, scoped, tag = 'internal scratch']
  %s0 = inlined_call_operand.hbm [shape: f32[16,32], index: 0, kind: input, shape index: {}]
  %s1 = inlined_call_operand.hbm [shape: bf16[32,32], index: 1, kind: input, shape index: {}]
  %s2 = inlined_call_operand.hbm [shape: bf16[32,32], index: 2, kind: input, shape index: {}]
  %s3 = inlined_call_operand.hbm [shape: bf16[32,32], index: 3, kind: input, shape index: {}]
  %s4 = inlined_call_operand.vmem [shape: f32[1,32], index: 4, kind: input, shape index: {}]
  %s5 = inlined_call_operand.vmem [shape: f32[1,32], index: 5, kind: input, shape index: {}]
  %s6 = inlined_call_operand.hbm [shape: f32[1,32], index: 6, kind: input, shape index: {}]
  %s7 = inlined_call_operand.vmem [shape: bf16[32,32], index: 7, kind: input, shape index: {}]
  %s8 = inlined_call_operand.hbm [shape: f32[1,32], index: 8, kind: input, shape index: {}]
  %s9 = inlined_call_operand.vmem [shape: bf16[32,32], index: 9, kind: input, shape index: {}]
  %s10 = inlined_call_operand.vmem [shape: f32[1,32], index: 10, kind: input, shape index: {}]
  %s11 = inlined_call_operand.vmem [shape: f32[1,32], index: 11, kind: input, shape index: {}]
  %s12 = inlined_call_operand.vmem [shape: f32[1,32], index: 12, kind: input, shape index: {}]
  %s13 = inlined_call_operand.hbm [shape: f32[16,32], index: 13, kind: output, shape index: {}]
  %s14 = sld [smem:[#allocation0]]
  $region109: #{tpu_custom_call.1} parent=0
    _
  %s16 = ssub.s32 1, %s14
  %s17 = scalar_select 0, %s16, %s14
  $region1: #{tpu_custom_call.1} parent=0
    #allocation2 [shape = 'u8[8192]{0}', space=vmem, size = 0x2000, scoped, tag = 'input window, operand 0']
    #allocation3 [shape = 's32[2]{0}', space=sflag, size = 0x8, scoped, tag = 'scoped memory for tpu_custom_call.1']
    #allocation4 [shape = 's32[2]{0}', space=sflag, size = 0x8, scoped, tag = 'scoped memory for tpu_custom_call.1']
    #allocation5 [shape = 'u8[8192]{0}', space=vmem, size = 0x2000, scoped, tag = 'input window, operand 1, single buffered']
    #allocation6 [shape = 's32[1]{0}', space=sflag, size = 0x4, scoped, tag = 'scoped memory for tpu_custom_call.1']
    #allocation7 [shape = 'u8[8192]{0}', space=vmem, size = 0x2000, scoped, tag = 'input window, operand 2, single buffered']
    #allocation8 [shape = 'u8[8192]{0}', space=vmem, size = 0x2000, scoped, tag = 'input window, operand 3, single buffered']
    #allocation9 [shape = 's32[1]{0}', space=sflag, size = 0x4, scoped, tag = 'scoped memory for tpu_custom_call.1']
    #allocation10 [shape = 'u8[512]{0}', space=vmem, size = 0x400, scoped, tag = 'input window, operand 6, single buffered']
    #allocation11 [shape = 'u8[512]{0}', space=vmem, size = 0x400, scoped, tag = 'input window, operand 8, single buffered']
    #allocation12 [shape = 's32[1]{0}', space=sflag, size = 0x4, scoped, tag = 'scoped memory for tpu_custom_call.1']
    #allocation13 [shape = 'u8[8192]{0}', space=vmem, size = 0x2000, scoped, tag = 'output window, operand 0']
    %18 = vsyncpa [#allocation3], 0
    %s19 = scalar_lea.sflag [#allocation3], 1
    %20 = vsyncpa %s19, 0
    %21 = vsyncpa [#allocation6], 0
    %22 = vsyncpa [#allocation9], 0
    %23 = vsyncpa [#allocation12], 0
    %24 = vsyncpa [#allocation4], 0
    %s25 = scalar_lea.sflag [#allocation4], 1
    %26 = vsyncpa %s25, 0
    loop: start=0, step=1, limit=4
    $region2: #{tpu_custom_call.1} parent=1 // loop_pre_header
      _
    $region3: #{tpu_custom_call.1} parent=1 // loop_header
      %s28 = sphi 0, %s32
      %p29 = scmp.ge.s32.totalorder %s28, 4
      %s38 = sphi 0, %s40
      %s41 = sphi 0, %s38
      %s42 = sphi 0, %s41
      %s58 = sphi 0, %s42
      %s62 = sphi 0, %s62
      %s64 = sphi 0, %s62
      %s65 = sphi 0, %s64
      %s79 = sphi 0, %s65
      %s83 = sphi 0, %s83
      %s85 = sphi 0, %s83
      %s86 = sphi 0, %s85
      %s100 = sphi 0, %s86
      %s104 = sphi 0, %s104
      %s106 = sphi 0, %s104
      %s107 = sphi 0, %s106
      %s121 = sphi 0, %s107
      %s125 = sphi 0, %s125
      %s127 = sphi 0, %s125
      %s128 = sphi 0, %s127
      %s142 = sphi 0, %s128
      %s146 = sphi 0, %s146
      %s148 = sphi 0, %s146
      %s149 = sphi 0, %s148
      %s163 = sphi 0, %s149
      %s167 = sphi 0, %s167
      %s169 = sphi 0, %s167
      %s170 = sphi 0, %s169
      %s184 = sphi 0, %s170
      %s188 = sphi 0, %s188
      %s190 = sphi 0, %s188
      %s191 = sphi 0, %s190
      %s205 = sphi 0, %s191
      %s209 = sphi 0, %s209
      %s211 = sphi 0, %s209
      %s212 = sphi 0, %s211
      %s226 = sphi 0, %s212
      %s230 = sphi 0, %s230
      %s232 = sphi 0, %s230
      %s233 = sphi 0, %s232
      %s247 = sphi 0, %s233
      %s251 = sphi 0, %s251
      %s253 = sphi 0, %s251
      %s254 = sphi 0, %s253
      %s268 = sphi 0, %s254
      %s272 = sphi 0, %s272
      %s274 = sphi 0, %s272
      %s275 = sphi 0, %s274
      %s289 = sphi 0, %s275
      %s293 = sphi 0, %s293
      %s295 = sphi 0, %s293
      %s296 = sphi 0, %s295
      %s310 = sphi 0, %s296
      %s316 = sphi 0, %s318
      %s319 = sphi 0, %s316
      %s320 = sphi 0, %s319
      %s336 = sphi 0, %s320
    $region4: #{tpu_custom_call.1} parent=1 // loop_header_branch
      %31 = sbr.rel (%p29) target = $region8
    $region5: #{tpu_custom_call.1} parent=1 // loop_body
      %s33 = ssub.s32 %s28, 1
      %s34 = ssub.s32 %s28, 2
      %s35 = sadd.s32 %s28, 1
      %s36 = ssub.s32 %s28, %s35
      %p37 = scmp.eq.s32.totalorder %s36, 0
      %s39 = sadd.s32 %s38, 1
      %s40 = scalar_select %p37, %s38, %s39
      %p43 = pneg %p37
      %p44 = scmp.eq.s32.totalorder %s28, 1
      %p45 = por %p43, %p44
      %p46 = scmp.ne.s32.totalorder %s38, %s41
      %p47 = scmp.eq.s32.totalorder %s28, 0
      %p48 = por %p46, %p47
      %p49 = scmp.ne.s32.totalorder %s38, %s41
      %p50 = scmp.eq.s32.totalorder %s33, 1
      %p51 = por %p49, %p50
      %p52 = scmp.ne.s32.totalorder %s41, %s42
      %p53 = scmp.eq.s32.totalorder %s33, 0
      %p54 = por %p52, %p53
      %p55 = scmp.ne.s32.totalorder %s41, %s42
      %p56 = scmp.eq.s32.totalorder %s34, 1
      %p57 = por %p55, %p56
      %p59 = scmp.ne.s32.totalorder %s42, %s58
      %p60 = scmp.eq.s32.totalorder %s34, 0
      %p61 = por %p59, %p60
      %s63 = sadd.s32 %s62, 1
      %p66 = scmp.eq.s32.totalorder %s28, 1
      %p67 = scmp.ne.s32.totalorder %s62, %s64
      %p68 = scmp.eq.s32.totalorder %s28, 0
      %p69 = por %p67, %p68
      %p70 = scmp.ne.s32.totalorder %s62, %s64
      %p71 = scmp.eq.s32.totalorder %s33, 1
      %p72 = por %p70, %p71
      %p73 = scmp.ne.s32.totalorder %s64, %s65
      %p74 = scmp.eq.s32.totalorder %s33, 0
      %p75 = por %p73, %p74
      %p76 = scmp.ne.s32.totalorder %s64, %s65
      %p77 = scmp.eq.s32.totalorder %s34, 1
      %p78 = por %p76, %p77
      %p80 = scmp.ne.s32.totalorder %s65, %s79
      %p81 = scmp.eq.s32.totalorder %s34, 0
      %p82 = por %p80, %p81
      %s84 = sadd.s32 %s83, 1
      %p87 = scmp.eq.s32.totalorder %s28, 1
      %p88 = scmp.ne.s32.totalorder %s83, %s85
      %p89 = scmp.eq.s32.totalorder %s28, 0
      %p90 = por %p88, %p89
      %p91 = scmp.ne.s32.totalorder %s83, %s85
      %p92 = scmp.eq.s32.totalorder %s33, 1
      %p93 = por %p91, %p92
      %p94 = scmp.ne.s32.totalorder %s85, %s86
      %p95 = scmp.eq.s32.totalorder %s33, 0
      %p96 = por %p94, %p95
      %p97 = scmp.ne.s32.totalorder %s85, %s86
      %p98 = scmp.eq.s32.totalorder %s34, 1
      %p99 = por %p97, %p98
      %p101 = scmp.ne.s32.totalorder %s86, %s100
      %p102 = scmp.eq.s32.totalorder %s34, 0
      %p103 = por %p101, %p102
      %s105 = sadd.s32 %s104, 1
      %p108 = scmp.eq.s32.totalorder %s28, 1
      %p109 = scmp.ne.s32.totalorder %s104, %s106
      %p110 = scmp.eq.s32.totalorder %s28, 0
      %p111 = por %p109, %p110
      %p112 = scmp.ne.s32.totalorder %s104, %s106
      %p113 = scmp.eq.s32.totalorder %s33, 1
      %p114 = por %p112, %p113
      %p115 = scmp.ne.s32.totalorder %s106, %s107
      %p116 = scmp.eq.s32.totalorder %s33, 0
      %p117 = por %p115, %p116
      %p118 = scmp.ne.s32.totalorder %s106, %s107
      %p119 = scmp.eq.s32.totalorder %s34, 1
      %p120 = por %p118, %p119
      %p122 = scmp.ne.s32.totalorder %s107, %s121
      %p123 = scmp.eq.s32.totalorder %s34, 0
      %p124 = por %p122, %p123
      %s126 = sadd.s32 %s125, 1
      %p129 = scmp.eq.s32.totalorder %s28, 1
      %p130 = scmp.ne.s32.totalorder %s125, %s127
      %p131 = scmp.eq.s32.totalorder %s28, 0
      %p132 = por %p130, %p131
      %p133 = scmp.ne.s32.totalorder %s125, %s127
      %p134 = scmp.eq.s32.totalorder %s33, 1
      %p135 = por %p133, %p134
      %p136 = scmp.ne.s32.totalorder %s127, %s128
      %p137 = scmp.eq.s32.totalorder %s33, 0
      %p138 = por %p136, %p137
      %p139 = scmp.ne.s32.totalorder %s127, %s128
      %p140 = scmp.eq.s32.totalorder %s34, 1
      %p141 = por %p139, %p140
      %p143 = scmp.ne.s32.totalorder %s128, %s142
      %p144 = scmp.eq.s32.totalorder %s34, 0
      %p145 = por %p143, %p144
      %s147 = sadd.s32 %s146, 1
      %p150 = scmp.eq.s32.totalorder %s28, 1
      %p151 = scmp.ne.s32.totalorder %s146, %s148
      %p152 = scmp.eq.s32.totalorder %s28, 0
      %p153 = por %p151, %p152
      %p154 = scmp.ne.s32.totalorder %s146, %s148
      %p155 = scmp.eq.s32.totalorder %s33, 1
      %p156 = por %p154, %p155
      %p157 = scmp.ne.s32.totalorder %s148, %s149
      %p158 = scmp.eq.s32.totalorder %s33, 0
      %p159 = por %p157, %p158
      %p160 = scmp.ne.s32.totalorder %s148, %s149
      %p161 = scmp.eq.s32.totalorder %s34, 1
      %p162 = por %p160, %p161
      %p164 = scmp.ne.s32.totalorder %s149, %s163
      %p165 = scmp.eq.s32.totalorder %s34, 0
      %p166 = por %p164, %p165
      %s168 = sadd.s32 %s167, 1
      %p171 = scmp.eq.s32.totalorder %s28, 1
      %p172 = scmp.ne.s32.totalorder %s167, %s169
      %p173 = scmp.eq.s32.totalorder %s28, 0
      %p174 = por %p172, %p173
      %p175 = scmp.ne.s32.totalorder %s167, %s169
      %p176 = scmp.eq.s32.totalorder %s33, 1
      %p177 = por %p175, %p176
      %p178 = scmp.ne.s32.totalorder %s169, %s170
      %p179 = scmp.eq.s32.totalorder %s33, 0
      %p180 = por %p178, %p179
      %p181 = scmp.ne.s32.totalorder %s169, %s170
      %p182 = scmp.eq.s32.totalorder %s34, 1
      %p183 = por %p181, %p182
      %p185 = scmp.ne.s32.totalorder %s170, %s184
      %p186 = scmp.eq.s32.totalorder %s34, 0
      %p187 = por %p185, %p186
      %s189 = sadd.s32 %s188, 1
      %p192 = scmp.eq.s32.totalorder %s28, 1
      %p193 = scmp.ne.s32.totalorder %s188, %s190
      %p194 = scmp.eq.s32.totalorder %s28, 0
      %p195 = por %p193, %p194
      %p196 = scmp.ne.s32.totalorder %s188, %s190
      %p197 = scmp.eq.s32.totalorder %s33, 1
      %p198 = por %p196, %p197
      %p199 = scmp.ne.s32.totalorder %s190, %s191
      %p200 = scmp.eq.s32.totalorder %s33, 0
      %p201 = por %p199, %p200
      %p202 = scmp.ne.s32.totalorder %s190, %s191
      %p203 = scmp.eq.s32.totalorder %s34, 1
      %p204 = por %p202, %p203
      %p206 = scmp.ne.s32.totalorder %s191, %s205
      %p207 = scmp.eq.s32.totalorder %s34, 0
      %p208 = por %p206, %p207
      %s210 = sadd.s32 %s209, 1
      %p213 = scmp.eq.s32.totalorder %s28, 1
      %p214 = scmp.ne.s32.totalorder %s209, %s211
      %p215 = scmp.eq.s32.totalorder %s28, 0
      %p216 = por %p214, %p215
      %p217 = scmp.ne.s32.totalorder %s209, %s211
      %p218 = scmp.eq.s32.totalorder %s33, 1
      %p219 = por %p217, %p218
      %p220 = scmp.ne.s32.totalorder %s211, %s212
      %p221 = scmp.eq.s32.totalorder %s33, 0
      %p222 = por %p220, %p221
      %p223 = scmp.ne.s32.totalorder %s211, %s212
      %p224 = scmp.eq.s32.totalorder %s34, 1
      %p225 = por %p223, %p224
      %p227 = scmp.ne.s32.totalorder %s212, %s226
      %p228 = scmp.eq.s32.totalorder %s34, 0
      %p229 = por %p227, %p228
      %s231 = sadd.s32 %s230, 1
      %p234 = scmp.eq.s32.totalorder %s28, 1
      %p235 = scmp.ne.s32.totalorder %s230, %s232
      %p236 = scmp.eq.s32.totalorder %s28, 0
      %p237 = por %p235, %p236
      %p238 = scmp.ne.s32.totalorder %s230, %s232
      %p239 = scmp.eq.s32.totalorder %s33, 1
      %p240 = por %p238, %p239
      %p241 = scmp.ne.s32.totalorder %s232, %s233
      %p242 = scmp.eq.s32.totalorder %s33, 0
      %p243 = por %p241, %p242
      %p244 = scmp.ne.s32.totalorder %s232, %s233
      %p245 = scmp.eq.s32.totalorder %s34, 1
      %p246 = por %p244, %p245
      %p248 = scmp.ne.s32.totalorder %s233, %s247
      %p249 = scmp.eq.s32.totalorder %s34, 0
      %p250 = por %p248, %p249
      %s252 = sadd.s32 %s251, 1
      %p255 = scmp.eq.s32.totalorder %s28, 1
      %p256 = scmp.ne.s32.totalorder %s251, %s253
      %p257 = scmp.eq.s32.totalorder %s28, 0
      %p258 = por %p256, %p257
      %p259 = scmp.ne.s32.totalorder %s251, %s253
      %p260 = scmp.eq.s32.totalorder %s33, 1
      %p261 = por %p259, %p260
      %p262 = scmp.ne.s32.totalorder %s253, %s254
      %p263 = scmp.eq.s32.totalorder %s33, 0
      %p264 = por %p262, %p263
      %p265 = scmp.ne.s32.totalorder %s253, %s254
      %p266 = scmp.eq.s32.totalorder %s34, 1
      %p267 = por %p265, %p266
      %p269 = scmp.ne.s32.totalorder %s254, %s268
      %p270 = scmp.eq.s32.totalorder %s34, 0
      %p271 = por %p269, %p270
      %s273 = sadd.s32 %s272, 1
      %p276 = scmp.eq.s32.totalorder %s28, 1
      %p277 = scmp.ne.s32.totalorder %s272, %s274
      %p278 = scmp.eq.s32.totalorder %s28, 0
      %p279 = por %p277, %p278
      %p280 = scmp.ne.s32.totalorder %s272, %s274
      %p281 = scmp.eq.s32.totalorder %s33, 1
      %p282 = por %p280, %p281
      %p283 = scmp.ne.s32.totalorder %s274, %s275
      %p284 = scmp.eq.s32.totalorder %s33, 0
      %p285 = por %p283, %p284
      %p286 = scmp.ne.s32.totalorder %s274, %s275
      %p287 = scmp.eq.s32.totalorder %s34, 1
      %p288 = por %p286, %p287
      %p290 = scmp.ne.s32.totalorder %s275, %s289
      %p291 = scmp.eq.s32.totalorder %s34, 0
      %p292 = por %p290, %p291
      %s294 = sadd.s32 %s293, 1
      %p297 = scmp.eq.s32.totalorder %s28, 1
      %p298 = scmp.ne.s32.totalorder %s293, %s295
      %p299 = scmp.eq.s32.totalorder %s28, 0
      %p300 = por %p298, %p299
      %p301 = scmp.ne.s32.totalorder %s293, %s295
      %p302 = scmp.eq.s32.totalorder %s33, 1
      %p303 = por %p301, %p302
      %p304 = scmp.ne.s32.totalorder %s295, %s296
      %p305 = scmp.eq.s32.totalorder %s33, 0
      %p306 = por %p304, %p305
      %p307 = scmp.ne.s32.totalorder %s295, %s296
      %p308 = scmp.eq.s32.totalorder %s34, 1
      %p309 = por %p307, %p308
      %p311 = scmp.ne.s32.totalorder %s296, %s310
      %p312 = scmp.eq.s32.totalorder %s34, 0
      %p313 = por %p311, %p312
      %s314 = ssub.s32 %s28, %s35
      %p315 = scmp.eq.s32.totalorder %s314, 0
      %s317 = sadd.s32 %s316, 1
      %s318 = scalar_select %p315, %s316, %s317
      %p321 = pneg %p315
      %p322 = scmp.eq.s32.totalorder %s28, 1
      %p323 = por %p321, %p322
      %p324 = scmp.ne.s32.totalorder %s316, %s319
      %p325 = scmp.eq.s32.totalorder %s28, 0
      %p326 = por %p324, %p325
      %p327 = scmp.ne.s32.totalorder %s316, %s319
      %p328 = scmp.eq.s32.totalorder %s33, 1
      %p329 = por %p327, %p328
      %p330 = scmp.ne.s32.totalorder %s319, %s320
      %p331 = scmp.eq.s32.totalorder %s33, 0
      %p332 = por %p330, %p331
      %p333 = scmp.ne.s32.totalorder %s319, %s320
      %p334 = scmp.eq.s32.totalorder %s34, 1
      %p335 = por %p333, %p334
      %p337 = scmp.ne.s32.totalorder %s320, %s336
      %p338 = scmp.eq.s32.totalorder %s34, 0
      %p339 = por %p337, %p338
      %p340 = scmp.le.s32.totalorder 1, %s28
      %p341 = scmp.lt.s32.totalorder %s28, 3
      %p342 = pnand %p340, %p341
      %p343 = pneg %p342
      // Predicated region
      $region9: #{tpu_custom_call.1} parent=5 // pred_check
        _
      $region10: #{tpu_custom_call.1} parent=5 // pred_check_branch
        %345 = sbr.rel (%p342) target = $region12
      $region11: #{tpu_custom_call.1} parent=5 // pred_region
        %s346 = ssub.s32 %s28, 1
        // Predicated region
        $region13: #{tpu_custom_call.1} parent=11 // pred_check
          %p347 = pneg %p75
        $region14: #{tpu_custom_call.1} parent=11 // pred_check_branch
          %349 = sbr.rel (%p347) target = $region16
        $region15: #{tpu_custom_call.1} parent=11 // pred_region
          %s351 = ssub.s32 256, 256
          %352 = vsyncadd [#allocation6], %s351
          %s353 = sshll.u32 [#allocation5], 4
          %s354 = int_to_ptr.vmem [resolvable:$true] %s353
          %359 = dma.hbm_to_vmem [thread:$0]  %s1, 256, %s354, [#allocation6], 64, 64, 4
        $region16: #{tpu_custom_call.1} parent=11 // pred_fallthru
          _
        // Predicated region
        $region17: #{tpu_custom_call.1} parent=11 // pred_check
          %p360 = pneg %p96
        $region18: #{tpu_custom_call.1} parent=11 // pred_check_branch
          %362 = sbr.rel (%p360) target = $region20
        $region19: #{tpu_custom_call.1} parent=11 // pred_region
          %s364 = ssub.s32 256, 256
          %365 = vsyncadd [#allocation6], %s364
          %s366 = sshll.u32 [#allocation7], 4
          %s367 = int_to_ptr.vmem [resolvable:$true] %s366
          %372 = dma.hbm_to_vmem [thread:$0]  %s2, 256, %s367, [#allocation6], 64, 64, 4
        $region20: #{tpu_custom_call.1} parent=11 // pred_fallthru
          _
        // Predicated region
        $region21: #{tpu_custom_call.1} parent=11 // pred_check
          %p373 = pneg %p117
        $region22: #{tpu_custom_call.1} parent=11 // pred_check_branch
          %375 = sbr.rel (%p373) target = $region24
        $region23: #{tpu_custom_call.1} parent=11 // pred_region
          %s377 = ssub.s32 256, 256
          %378 = vsyncadd [#allocation9], %s377
          %s379 = sshll.u32 [#allocation8], 4
          %s380 = int_to_ptr.vmem [resolvable:$true] %s379
          %385 = dma.hbm_to_vmem [thread:$0]  %s3, 256, %s380, [#allocation9], 64, 64, 4
        $region24: #{tpu_custom_call.1} parent=11 // pred_fallthru
          _
        // Predicated region
        $region25: #{tpu_custom_call.1} parent=11 // pred_check
          %p386 = pneg %p138
        $region26: #{tpu_custom_call.1} parent=11 // pred_check_branch
          %388 = sbr.rel (%p386) target = $region28
        $region27: #{tpu_custom_call.1} parent=11 // pred_region
          _
        $region28: #{tpu_custom_call.1} parent=11 // pred_fallthru
          _
        // Predicated region
        $region29: #{tpu_custom_call.1} parent=11 // pred_check
          %p389 = pneg %p159
        $region30: #{tpu_custom_call.1} parent=11 // pred_check_branch
          %391 = sbr.rel (%p389) target = $region32
        $region31: #{tpu_custom_call.1} parent=11 // pred_region
          _
        $region32: #{tpu_custom_call.1} parent=11 // pred_fallthru
          _
        // Predicated region
        $region33: #{tpu_custom_call.1} parent=11 // pred_check
          %p392 = pneg %p180
        $region34: #{tpu_custom_call.1} parent=11 // pred_check_branch
          %394 = sbr.rel (%p392) target = $region36
        $region35: #{tpu_custom_call.1} parent=11 // pred_region
          %s396 = ssub.s32 16, 16
          %397 = vsyncadd [#allocation9], %s396
          %s399 = sshll.u32 [#allocation10], 4
          %s400 = int_to_ptr.vmem [resolvable:$true] %s399
          %402 = dma.hbm_to_vmem [thread:$0]  %s6, 16, %s400, [#allocation9]
        $region36: #{tpu_custom_call.1} parent=11 // pred_fallthru
          _
        // Predicated region
        $region37: #{tpu_custom_call.1} parent=11 // pred_check
          %p403 = pneg %p201
        $region38: #{tpu_custom_call.1} parent=11 // pred_check_branch
          %405 = sbr.rel (%p403) target = $region40
        $region39: #{tpu_custom_call.1} parent=11 // pred_region
          _
        $region40: #{tpu_custom_call.1} parent=11 // pred_fallthru
          _
        // Predicated region
        $region41: #{tpu_custom_call.1} parent=11 // pred_check
          %p406 = pneg %p222
        $region42: #{tpu_custom_call.1} parent=11 // pred_check_branch
          %408 = sbr.rel (%p406) target = $region44
        $region43: #{tpu_custom_call.1} parent=11 // pred_region
          %s410 = ssub.s32 16, 16
          %411 = vsyncadd [#allocation12], %s410
          %s413 = sshll.u32 [#allocation11], 4
          %s414 = int_to_ptr.vmem [resolvable:$true] %s413
          %416 = dma.hbm_to_vmem [thread:$0]  %s8, 16, %s414, [#allocation12]
        $region44: #{tpu_custom_call.1} parent=11 // pred_fallthru
          _
        // Predicated region
        $region45: #{tpu_custom_call.1} parent=11 // pred_check
          %p417 = pneg %p243
        $region46: #{tpu_custom_call.1} parent=11 // pred_check_branch
          %419 = sbr.rel (%p417) target = $region48
        $region47: #{tpu_custom_call.1} parent=11 // pred_region
          _
        $region48: #{tpu_custom_call.1} parent=11 // pred_fallthru
          _
        // Predicated region
        $region49: #{tpu_custom_call.1} parent=11 // pred_check
          %p420 = pneg %p264
        $region50: #{tpu_custom_call.1} parent=11 // pred_check_branch
          %422 = sbr.rel (%p420) target = $region52
        $region51: #{tpu_custom_call.1} parent=11 // pred_region
          _
        $region52: #{tpu_custom_call.1} parent=11 // pred_fallthru
          _
        // Predicated region
        $region53: #{tpu_custom_call.1} parent=11 // pred_check
          %p423 = pneg %p285
        $region54: #{tpu_custom_call.1} parent=11 // pred_check_branch
          %425 = sbr.rel (%p423) target = $region56
        $region55: #{tpu_custom_call.1} parent=11 // pred_region
          _
        $region56: #{tpu_custom_call.1} parent=11 // pred_fallthru
          _
        // Predicated region
        $region57: #{tpu_custom_call.1} parent=11 // pred_check
          %p426 = pneg %p306
        $region58: #{tpu_custom_call.1} parent=11 // pred_check_branch
          %428 = sbr.rel (%p426) target = $region60
        $region59: #{tpu_custom_call.1} parent=11 // pred_region
          _
        $region60: #{tpu_custom_call.1} parent=11 // pred_fallthru
          _
      $region12: #{tpu_custom_call.1} parent=5 // pred_fallthru
        _
      %p429 = scmp.lt.s32.totalorder %s28, 2
      // Predicated region
      $region61: #{tpu_custom_call.1} parent=5 // pred_check
        %p430 = pneg %p429
      $region62: #{tpu_custom_call.1} parent=5 // pred_check_branch
        %432 = sbr.rel (%p430) target = $region64
      $region63: #{tpu_custom_call.1} parent=5 // pred_region
        // Predicated region
        $region65: #{tpu_custom_call.1} parent=63 // pred_check
          %p433 = pneg %p48
        $region66: #{tpu_custom_call.1} parent=63 // pred_check_branch
          %435 = sbr.rel (%p433) target = $region68
        $region67: #{tpu_custom_call.1} parent=63 // pred_region
          %s436 = sand.u32 %s38, 1
          %s437 = scalar_lea.sflag [#allocation3], %s436
          %s438 = sand.u32 %s38, 1
          %s439 = smul.addr %s438, 8
          %s440 = scalar_lea.vmem [#allocation2], %s439
          %s442 = ssub.s32 128, 128
          %443 = vsyncadd %s437, %s442
          %s444 = smul.addr %s28, 128
          %s445 = scalar_lea.hbm %s0, %s444
          %s447 = sshll.u32 %s440, 4
          %s448 = int_to_ptr.vmem [resolvable:$true] %s447
          %450 = dma.hbm_to_vmem [thread:$0]  %s445, 128, %s448, %s437
        $region68: #{tpu_custom_call.1} parent=63 // pred_fallthru
          _
      $region64: #{tpu_custom_call.1} parent=5 // pred_fallthru
        _
      %p451 = scmp.le.s32.totalorder 1, %s28
      %p452 = scmp.lt.s32.totalorder %s28, 3
      %p453 = pnand %p451, %p452
      %p454 = pneg %p453
      // Predicated region
      $region69: #{tpu_custom_call.1} parent=5 // pred_check
        _
      $region70: #{tpu_custom_call.1} parent=5 // pred_check_branch
        %456 = sbr.rel (%p453) target = $region72
      $region71: #{tpu_custom_call.1} parent=5 // pred_region
        %s457 = ssub.s32 %s28, 1
        %s458 = sand.u32 %s41, 1
        %s459 = scalar_lea.sflag [#allocation3], %s458
        %s460 = sand.u32 %s41, 1
        %s461 = smul.addr %s460, 8
        %s462 = scalar_lea.vmem [#allocation2], %s461
        // Predicated region
        $region73: #{tpu_custom_call.1} parent=71 // pred_check
          %p463 = pneg %p54
        $region74: #{tpu_custom_call.1} parent=71 // pred_check_branch
          %465 = sbr.rel (%p463) target = $region76
        $region75: #{tpu_custom_call.1} parent=71 // pred_region
          %466 = dma.done %s459, 128
        $region76: #{tpu_custom_call.1} parent=71 // pred_fallthru
          _
        // Predicated region
        $region77: #{tpu_custom_call.1} parent=71 // pred_check
          %p467 = pneg %p75
        $region78: #{tpu_custom_call.1} parent=71 // pred_check_branch
          %469 = sbr.rel (%p467) target = $region80
        $region79: #{tpu_custom_call.1} parent=71 // pred_region
          %470 = dma.done [#allocation6], 256
        $region80: #{tpu_custom_call.1} parent=71 // pred_fallthru
          _
        // Predicated region
        $region81: #{tpu_custom_call.1} parent=71 // pred_check
          %p471 = pneg %p96
        $region82: #{tpu_custom_call.1} parent=71 // pred_check_branch
          %473 = sbr.rel (%p471) target = $region84
        $region83: #{tpu_custom_call.1} parent=71 // pred_region
          %474 = dma.done [#allocation6], 256
        $region84: #{tpu_custom_call.1} parent=71 // pred_fallthru
          _
        // Predicated region
        $region85: #{tpu_custom_call.1} parent=71 // pred_check
          %p475 = pneg %p117
        $region86: #{tpu_custom_call.1} parent=71 // pred_check_branch
          %477 = sbr.rel (%p475) target = $region88
        $region87: #{tpu_custom_call.1} parent=71 // pred_region
          %478 = dma.done [#allocation9], 256
        $region88: #{tpu_custom_call.1} parent=71 // pred_fallthru
          _
        // Predicated region
        $region89: #{tpu_custom_call.1} parent=71 // pred_check
          %p479 = pneg %p180
        $region90: #{tpu_custom_call.1} parent=71 // pred_check_branch
          %481 = sbr.rel (%p479) target = $region92
        $region91: #{tpu_custom_call.1} parent=71 // pred_region
          %482 = dma.done [#allocation9], 16
        $region92: #{tpu_custom_call.1} parent=71 // pred_fallthru
          _
        // Predicated region
        $region93: #{tpu_custom_call.1} parent=71 // pred_check
          %p483 = pneg %p222
        $region94: #{tpu_custom_call.1} parent=71 // pred_check_branch
          %485 = sbr.rel (%p483) target = $region96
        $region95: #{tpu_custom_call.1} parent=71 // pred_region
          %486 = dma.done [#allocation12], 16
        $region96: #{tpu_custom_call.1} parent=71 // pred_fallthru
          _
        %s487 = sand.u32 %s41, 1
        %s488 = scalar_lea.sflag [#allocation3], %s487
        %s489 = sand.u32 %s41, 1
        %s490 = smul.addr %s489, 8
        %s491 = scalar_lea.vmem [#allocation2], %s490
        %p492 = pneg %p54
        %p493 = pneg %p51
        %p494 = pneg %p75
        %p495 = pneg %p72
        %p496 = pneg %p96
        %p497 = pneg %p93
        %p498 = pneg %p117
        %p499 = pneg %p114
        %p500 = pneg %p138
        %p501 = pneg %p135
        %p502 = pneg %p159
        %p503 = pneg %p156
        %p504 = pneg %p180
        %p505 = pneg %p177
        %p506 = pneg %p201
        %p507 = pneg %p198
        %p508 = pneg %p222
        %p509 = pneg %p219
        %p510 = pneg %p243
        %p511 = pneg %p240
        %p512 = pneg %p264
        %p513 = pneg %p261
        %p514 = pneg %p285
        %p515 = pneg %p282
        %p516 = pneg %p306
        %p517 = pneg %p303
        %p518 = pneg %p332
        %p519 = pneg %p329
        %s520 = sand.u32 %s319, 1
        %s521 = scalar_lea.sflag [#allocation4], %s520
        %s522 = sand.u32 %s319, 1
        %s523 = smul.addr %s522, 8
        %s524 = scalar_lea.vmem [#allocation13], %s523
        %v526 = vld [vmem:[%s462] sm:$0xff]
        %v527 = vpack.c.bf16 %v526, %v526
        %v528 = vld [vmem:[#allocation5] sm:$0xf]
        %v529 = vld [vmem:[#allocation5 + $0x4] sm:$0xf]
        %v530 = vld [vmem:[#allocation5 + $0x8] sm:$0xf]
        %v531 = vld [vmem:[#allocation5 + $0xc] sm:$0xf]
        %v536 = vunpack.c.l.b16 %v528
        %v537 = vunpack.c.l.b16 %v529
        %v538 = vunpack.c.l.b16 %v530
        %v539 = vunpack.c.l.b16 %v531
        %v540 = vpack.c.b16 %v537, %v536
        %v541 = vpack.c.b16 %v539, %v538
        %vm544 = vcmask 261120
        %v546 = vsel %vm544, %v527, 0
        %548 = vmatprep.subr.bf16.mxu0 0
        %549 = vmatpush1.bf16.msra.mxu0 %v540
        %550 = vmatprep.subr.bf16.mxu0 0
        %551 = vmatpush1.bf16.msra.mxu0 %v541
        %552 = vmatprep.subr.bf16.mxu0 0
        %553 = vmatpush1.bf16.msra.mxu0 0
        %554 = vmatprep.subr.bf16.mxu0 0
        %555 = vmatpush1.bf16.msra.mxu0 0
        %556 = vmatprep.subr.bf16.mxu0 0
        %557 = vmatpush1.bf16.msra.mxu0 0
        %558 = vmatprep.subr.bf16.mxu0 0
        %559 = vmatpush1.bf16.msra.mxu0 0
        %560 = vmatprep.subr.bf16.mxu0 0
        %561 = vmatpush1.bf16.msra.mxu0 0
        %562 = vmatprep.subr.bf16.mxu0 0
        %563 = vmatpush1.bf16.msra.mxu0 0
        %564 = vmatprep.subr.bf16.mxu0 0
        %565 = vmatpush1.bf16.msra.mxu0 0
        %566 = vmatprep.subr.bf16.mxu0 0
        %567 = vmatpush1.bf16.msra.mxu0 0
        %568 = vmatprep.subr.bf16.mxu0 0
        %569 = vmatpush1.bf16.msra.mxu0 0
        %570 = vmatprep.subr.bf16.mxu0 0
        %571 = vmatpush1.bf16.msra.mxu0 0
        %572 = vmatprep.subr.bf16.mxu0 0
        %573 = vmatpush1.bf16.msra.mxu0 0
        %574 = vmatprep.subr.bf16.mxu0 0
        %575 = vmatpush1.bf16.msra.mxu0 0
        %576 = vmatprep.subr.bf16.mxu0 0
        %577 = vmatpush1.bf16.msra.mxu0 0
        %578 = vmatprep.subr.bf16.mxu0 0
        %579 = vmatpush1.bf16.msra.mxu0 0
        %580 = vmatprep.mubr.bf16.mxu0 0
        %581 = vmatmul.mubr.bf16.gmra.mrb[0].mxu0 %v546
        %v582 = vpop.f32.mrb[0].mxu0
        %v583 = vadd.f32 0.0, %v582
        %v584 = vpop.f32.mrb[0].mxu0
        %v585 = vpop.f32.mrb[0].mxu0
        %v586 = vpop.f32.mrb[0].mxu0
        %587 = vdwg.mxu0
        %v588 = vpack.c.bf16 %v583, %v583
        %v589 = vld [vmem:[#allocation7] sm:$0xf]
        %v590 = vld [vmem:[#allocation7 + $0x4] sm:$0xf]
        %v591 = vld [vmem:[#allocation7 + $0x8] sm:$0xf]
        %v592 = vld [vmem:[#allocation7 + $0xc] sm:$0xf]
        %v597 = vunpack.c.l.b16 %v589
        %v598 = vunpack.c.l.b16 %v590
        %v599 = vunpack.c.l.b16 %v591
        %v600 = vunpack.c.l.b16 %v592
        %v601 = vpack.c.b16 %v598, %v597
        %v602 = vpack.c.b16 %v600, %v599
        %605 = vmatprep.subr.bf16.mxu0 0
        %606 = vmatpush1.bf16.msra.mxu0 %v601
        %607 = vmatprep.subr.bf16.mxu0 0
        %608 = vmatpush1.bf16.msra.mxu0 %v602
        %609 = vmatprep.subr.bf16.mxu0 0
        %610 = vmatpush1.bf16.msra.mxu0 0
        %611 = vmatprep.subr.bf16.mxu0 0
        %612 = vmatpush1.bf16.msra.mxu0 0
        %613 = vmatprep.subr.bf16.mxu0 0
        %614 = vmatpush1.bf16.msra.mxu0 0
        %615 = vmatprep.subr.bf16.mxu0 0
        %616 = vmatpush1.bf16.msra.mxu0 0
        %617 = vmatprep.subr.bf16.mxu0 0
        %618 = vmatpush1.bf16.msra.mxu0 0
        %619 = vmatprep.subr.bf16.mxu0 0
        %620 = vmatpush1.bf16.msra.mxu0 0
        %621 = vmatprep.subr.bf16.mxu0 0
        %622 = vmatpush1.bf16.msra.mxu0 0
        %623 = vmatprep.subr.bf16.mxu0 0
        %624 = vmatpush1.bf16.msra.mxu0 0
        %625 = vmatprep.subr.bf16.mxu0 0
        %626 = vmatpush1.bf16.msra.mxu0 0
        %627 = vmatprep.subr.bf16.mxu0 0
        %628 = vmatpush1.bf16.msra.mxu0 0
        %629 = vmatprep.subr.bf16.mxu0 0
        %630 = vmatpush1.bf16.msra.mxu0 0
        %631 = vmatprep.subr.bf16.mxu0 0
        %632 = vmatpush1.bf16.msra.mxu0 0
        %633 = vmatprep.subr.bf16.mxu0 0
        %634 = vmatpush1.bf16.msra.mxu0 0
        %635 = vmatprep.subr.bf16.mxu0 0
        %636 = vmatpush1.bf16.msra.mxu0 0
        %637 = vmatprep.mubr.bf16.mxu0 0
        %638 = vmatmul.mubr.bf16.gmra.mrb[0].mxu0 %v546
        %v639 = vpop.f32.mrb[0].mxu0
        %v640 = vadd.f32 0.0, %v639
        %v641 = vpop.f32.mrb[0].mxu0
        %v642 = vpop.f32.mrb[0].mxu0
        %v643 = vpop.f32.mrb[0].mxu0
        %644 = vdwg.mxu0
        %v645 = vpack.c.bf16 %v640, %v640
        %v646 = vlaneseq
        %v647 = vshrl.u32 %v646, 7
        %v648 = vlaneseq
        %v649 = vand.u32 %v648, 127
        %vm650 = vcmp.le.s32.totalorder %v649, %v647
        %vm651 = vcmask 64512
        %v653 = vsel %vm651, %v588, 0
        %655 = vmatprep.subr.bf16.mxu0 0
        %656 = vmatpush1.bf16.xpose.msra.mxu0 %v653
        %657 = vmatprep.subr.bf16.mxu0 0
        %658 = vmatpush1.bf16.xpose.msra.mxu0 0
        %659 = vmatprep.subr.bf16.mxu0 0
        %660 = vmatpush1.bf16.xpose.msra.mxu0 0
        %661 = vmatprep.subr.bf16.mxu0 0
        %662 = vmatpush1.bf16.xpose.msra.mxu0 0
        %663 = vmatprep.subr.bf16.mxu0 0
        %664 = vmatpush1.bf16.xpose.msra.mxu0 0
        %665 = vmatprep.subr.bf16.mxu0 0
        %666 = vmatpush1.bf16.xpose.msra.mxu0 0
        %667 = vmatprep.subr.bf16.mxu0 0
        %668 = vmatpush1.bf16.xpose.msra.mxu0 0
        %669 = vmatprep.subr.bf16.mxu0 0
        %670 = vmatpush1.bf16.xpose.msra.mxu0 0
        %671 = vmatprep.subr.bf16.mxu0 0
        %672 = vmatpush1.bf16.xpose.msra.mxu0 0
        %673 = vmatprep.subr.bf16.mxu0 0
        %674 = vmatpush1.bf16.xpose.msra.mxu0 0
        %675 = vmatprep.subr.bf16.mxu0 0
        %676 = vmatpush1.bf16.xpose.msra.mxu0 0
        %677 = vmatprep.subr.bf16.mxu0 0
        %678 = vmatpush1.bf16.xpose.msra.mxu0 0
        %679 = vmatprep.subr.bf16.mxu0 0
        %680 = vmatpush1.bf16.xpose.msra.mxu0 0
        %681 = vmatprep.subr.bf16.mxu0 0
        %682 = vmatpush1.bf16.xpose.msra.mxu0 0
        %683 = vmatprep.subr.bf16.mxu0 0
        %684 = vmatpush1.bf16.xpose.msra.mxu0 0
        %685 = vmatprep.subr.bf16.mxu0 0
        %686 = vmatpush1.bf16.xpose.msra.mxu0 0
        %687 = vmatprep.mubr.bf16.mxu0 0
        %688 = vmatmul.mubr.bf16.gmra.mrb[0].mxu0 %v653
        %v689 = vpop.f32.mrb[0].mxu0
        %v690 = vadd.f32 0.0, %v689
        %v691 = vpop.f32.mrb[0].mxu0
        %v692 = vpop.f32.mrb[0].mxu0
        %v693 = vpop.f32.mrb[0].mxu0
        %694 = vdwg.mxu0
        %v695 = vsel %vm650, %v690, -1e+30
        %v696 = vsel %vm651, %v695, -inf
        %697 = vmax.xlane.f32.xlu0 %v696
        %v698 = vpop.xlane.xlu0 %697
        %v699 = vsub.f32 %v695, %v698
        %v700 = vmul.f32 %v699, 1.442695
        %v701 = vpow.pop %v700
        %v702 = vsel %vm651, %v701, 0.0
        %703 = vadd.xlane.f32.xlu0 %v702
        %v704 = vpop.xlane.xlu0 %703
        %v705 = vrcp.pop %v704
        %v706 = vmul.f32 %v701, %v705
        %v707 = vpack.c.bf16 %v706, %v706
        %v709 = vsel %vm651, %v707, 0
        %vm711 = vcmask 1043456
        %v713 = vsel %vm711, %v645, 0
        %715 = vmatprep.subr.bf16.mxu0 0
        %716 = vmatpush1.bf16.msra.mxu0 %v713
        %717 = vmatprep.subr.bf16.mxu0 0
        %718 = vmatpush1.bf16.msra.mxu0 0
        %719 = vmatprep.subr.bf16.mxu0 0
        %720 = vmatpush1.bf16.msra.mxu0 0
        %721 = vmatprep.subr.bf16.mxu0 0
        %722 = vmatpush1.bf16.msra.mxu0 0
        %723 = vmatprep.subr.bf16.mxu0 0
        %724 = vmatpush1.bf16.msra.mxu0 0
        %725 = vmatprep.subr.bf16.mxu0 0
        %726 = vmatpush1.bf16.msra.mxu0 0
        %727 = vmatprep.subr.bf16.mxu0 0
        %728 = vmatpush1.bf16.msra.mxu0 0
        %729 = vmatprep.subr.bf16.mxu0 0
        %730 = vmatpush1.bf16.msra.mxu0 0
        %731 = vmatprep.subr.bf16.mxu0 0
        %732 = vmatpush1.bf16.msra.mxu0 0
        %733 = vmatprep.subr.bf16.mxu0 0
        %734 = vmatpush1.bf16.msra.mxu0 0
        %735 = vmatprep.subr.bf16.mxu0 0
        %736 = vmatpush1.bf16.msra.mxu0 0
        %737 = vmatprep.subr.bf16.mxu0 0
        %738 = vmatpush1.bf16.msra.mxu0 0
        %739 = vmatprep.subr.bf16.mxu0 0
        %740 = vmatpush1.bf16.msra.mxu0 0
        %741 = vmatprep.subr.bf16.mxu0 0
        %742 = vmatpush1.bf16.msra.mxu0 0
        %743 = vmatprep.subr.bf16.mxu0 0
        %744 = vmatpush1.bf16.msra.mxu0 0
        %745 = vmatprep.subr.bf16.mxu0 0
        %746 = vmatpush1.bf16.msra.mxu0 0
        %747 = vmatprep.mubr.bf16.mxu0 0
        %748 = vmatmul.mubr.bf16.gmra.mrb[0].mxu0 %v709
        %v749 = vpop.f32.mrb[0].mxu0
        %v750 = vadd.f32 0.0, %v749
        %v751 = vpop.f32.mrb[0].mxu0
        %v752 = vpop.f32.mrb[0].mxu0
        %v753 = vpop.f32.mrb[0].mxu0
        %754 = vdwg.mxu0
        %756 = vrot.lane.b32.xlu0 %v588, 120
        %v757 = vpop.permute.xlu0 %756
        %v759 = vsel %vm651, %v757, 0
        %761 = vmatprep.subr.bf16.mxu0 0
        %762 = vmatpush1.bf16.xpose.msra.mxu0 %v759
        %763 = vmatprep.subr.bf16.mxu0 0
        %764 = vmatpush1.bf16.xpose.msra.mxu0 0
        %765 = vmatprep.subr.bf16.mxu0 0
        %766 = vmatpush1.bf16.xpose.msra.mxu0 0
        %767 = vmatprep.subr.bf16.mxu0 0
        %768 = vmatpush1.bf16.xpose.msra.mxu0 0
        %769 = vmatprep.subr.bf16.mxu0 0
        %770 = vmatpush1.bf16.xpose.msra.mxu0 0
        %771 = vmatprep.subr.bf16.mxu0 0
        %772 = vmatpush1.bf16.xpose.msra.mxu0 0
        %773 = vmatprep.subr.bf16.mxu0 0
        %774 = vmatpush1.bf16.xpose.msra.mxu0 0
        %775 = vmatprep.subr.bf16.mxu0 0
        %776 = vmatpush1.bf16.xpose.msra.mxu0 0
        %777 = vmatprep.subr.bf16.mxu0 0
        %778 = vmatpush1.bf16.xpose.msra.mxu0 0
        %779 = vmatprep.subr.bf16.mxu0 0
        %780 = vmatpush1.bf16.xpose.msra.mxu0 0
        %781 = vmatprep.subr.bf16.mxu0 0
        %782 = vmatpush1.bf16.xpose.msra.mxu0 0
        %783 = vmatprep.subr.bf16.mxu0 0
        %784 = vmatpush1.bf16.xpose.msra.mxu0 0
        %785 = vmatprep.subr.bf16.mxu0 0
        %786 = vmatpush1.bf16.xpose.msra.mxu0 0
        %787 = vmatprep.subr.bf16.mxu0 0
        %788 = vmatpush1.bf16.xpose.msra.mxu0 0
        %789 = vmatprep.subr.bf16.mxu0 0
        %790 = vmatpush1.bf16.xpose.msra.mxu0 0
        %791 = vmatprep.subr.bf16.mxu0 0
        %792 = vmatpush1.bf16.xpose.msra.mxu0 0
        %793 = vmatprep.mubr.bf16.mxu0 0
        %794 = vmatmul.mubr.bf16.gmra.mrb[0].mxu0 %v759
        %v795 = vpop.f32.mrb[0].mxu0
        %v796 = vadd.f32 0.0, %v795
        %v797 = vpop.f32.mrb[0].mxu0
        %v798 = vpop.f32.mrb[0].mxu0
        %v799 = vpop.f32.mrb[0].mxu0
        %800 = vdwg.mxu0
        %v801 = vsel %vm650, %v796, -1e+30
        %v802 = vsel %vm651, %v801, -inf
        %803 = vmax.xlane.f32.xlu0 %v802
        %v804 = vpop.xlane.xlu0 %803
        %v805 = vsub.f32 %v801, %v804
        %v806 = vmul.f32 %v805, 1.442695
        %v807 = vpow.pop %v806
        %v808 = vsel %vm651, %v807, 0.0
        %809 = vadd.xlane.f32.xlu0 %v808
        %v810 = vpop.xlane.xlu0 %809
        %v811 = vrcp.pop %v810
        %v812 = vmul.f32 %v807, %v811
        %v813 = vpack.c.bf16 %v812, %v812
        %815 = vrot.lane.b32.xlu0 %v645, 120
        %v816 = vpop.permute.xlu0 %815
        %v818 = vsel %vm651, %v813, 0
        %v821 = vsel %vm711, %v816, 0
        %823 = vmatprep.subr.bf16.mxu0 0
        %824 = vmatpush1.bf16.msra.mxu0 %v821
        %825 = vmatprep.subr.bf16.mxu0 0
        %826 = vmatpush1.bf16.msra.mxu0 0
        %827 = vmatprep.subr.bf16.mxu0 0
        %828 = vmatpush1.bf16.msra.mxu0 0
        %829 = vmatprep.subr.bf16.mxu0 0
        %830 = vmatpush1.bf16.msra.mxu0 0
        %831 = vmatprep.subr.bf16.mxu0 0
        %832 = vmatpush1.bf16.msra.mxu0 0
        %833 = vmatprep.subr.bf16.mxu0 0
        %834 = vmatpush1.bf16.msra.mxu0 0
        %835 = vmatprep.subr.bf16.mxu0 0
        %836 = vmatpush1.bf16.msra.mxu0 0
        %837 = vmatprep.subr.bf16.mxu0 0
        %838 = vmatpush1.bf16.msra.mxu0 0
        %839 = vmatprep.subr.bf16.mxu0 0
        %840 = vmatpush1.bf16.msra.mxu0 0
        %841 = vmatprep.subr.bf16.mxu0 0
        %842 = vmatpush1.bf16.msra.mxu0 0
        %843 = vmatprep.subr.bf16.mxu0 0
        %844 = vmatpush1.bf16.msra.mxu0 0
        %845 = vmatprep.subr.bf16.mxu0 0
        %846 = vmatpush1.bf16.msra.mxu0 0
        %847 = vmatprep.subr.bf16.mxu0 0
        %848 = vmatpush1.bf16.msra.mxu0 0
        %849 = vmatprep.subr.bf16.mxu0 0
        %850 = vmatpush1.bf16.msra.mxu0 0
        %851 = vmatprep.subr.bf16.mxu0 0
        %852 = vmatpush1.bf16.msra.mxu0 0
        %853 = vmatprep.subr.bf16.mxu0 0
        %854 = vmatpush1.bf16.msra.mxu0 0
        %855 = vmatprep.mubr.bf16.mxu0 0
        %856 = vmatmul.mubr.bf16.gmra.mrb[0].mxu0 %v818
        %v857 = vpop.f32.mrb[0].mxu0
        %v858 = vadd.f32 0.0, %v857
        %v859 = vpop.f32.mrb[0].mxu0
        %v860 = vpop.f32.mrb[0].mxu0
        %v861 = vpop.f32.mrb[0].mxu0
        %862 = vdwg.mxu0
        %863 = vrot.lane.b32.xlu0 %v588, 112
        %v864 = vpop.permute.xlu0 %863
        %v866 = vsel %vm651, %v864, 0
        %868 = vmatprep.subr.bf16.mxu0 0
        %869 = vmatpush1.bf16.xpose.msra.mxu0 %v866
        %870 = vmatprep.subr.bf16.mxu0 0
        %871 = vmatpush1.bf16.xpose.msra.mxu0 0
        %872 = vmatprep.subr.bf16.mxu0 0
        %873 = vmatpush1.bf16.xpose.msra.mxu0 0
        %874 = vmatprep.subr.bf16.mxu0 0
        %875 = vmatpush1.bf16.xpose.msra.mxu0 0
        %876 = vmatprep.subr.bf16.mxu0 0
        %877 = vmatpush1.bf16.xpose.msra.mxu0 0
        %878 = vmatprep.subr.bf16.mxu0 0
        %879 = vmatpush1.bf16.xpose.msra.mxu0 0
        %880 = vmatprep.subr.bf16.mxu0 0
        %881 = vmatpush1.bf16.xpose.msra.mxu0 0
        %882 = vmatprep.subr.bf16.mxu0 0
        %883 = vmatpush1.bf16.xpose.msra.mxu0 0
        %884 = vmatprep.subr.bf16.mxu0 0
        %885 = vmatpush1.bf16.xpose.msra.mxu0 0
        %886 = vmatprep.subr.bf16.mxu0 0
        %887 = vmatpush1.bf16.xpose.msra.mxu0 0
        %888 = vmatprep.subr.bf16.mxu0 0
        %889 = vmatpush1.bf16.xpose.msra.mxu0 0
        %890 = vmatprep.subr.bf16.mxu0 0
        %891 = vmatpush1.bf16.xpose.msra.mxu0 0
        %892 = vmatprep.subr.bf16.mxu0 0
        %893 = vmatpush1.bf16.xpose.msra.mxu0 0
        %894 = vmatprep.subr.bf16.mxu0 0
        %895 = vmatpush1.bf16.xpose.msra.mxu0 0
        %896 = vmatprep.subr.bf16.mxu0 0
        %897 = vmatpush1.bf16.xpose.msra.mxu0 0
        %898 = vmatprep.subr.bf16.mxu0 0
        %899 = vmatpush1.bf16.xpose.msra.mxu0 0
        %900 = vmatprep.mubr.bf16.mxu0 0
        %901 = vmatmul.mubr.bf16.gmra.mrb[0].mxu0 %v866
        %v902 = vpop.f32.mrb[0].mxu0
        %v903 = vadd.f32 0.0, %v902
        %v904 = vpop.f32.mrb[0].mxu0
        %v905 = vpop.f32.mrb[0].mxu0
        %v906 = vpop.f32.mrb[0].mxu0
        %907 = vdwg.mxu0
        %v908 = vsel %vm650, %v903, -1e+30
        %v909 = vsel %vm651, %v908, -inf
        %910 = vmax.xlane.f32.xlu0 %v909
        %v911 = vpop.xlane.xlu0 %910
        %v912 = vsub.f32 %v908, %v911
        %v913 = vmul.f32 %v912, 1.442695
        %v914 = vpow.pop %v913
        %v915 = vsel %vm651, %v914, 0.0
        %916 = vadd.xlane.f32.xlu0 %v915
        %v917 = vpop.xlane.xlu0 %916
        %v918 = vrcp.pop %v917
        %v919 = vmul.f32 %v914, %v918
        %v920 = vpack.c.bf16 %v919, %v919
        %921 = vrot.lane.b32.xlu0 %v645, 112
        %v922 = vpop.permute.xlu0 %921
        %v924 = vsel %vm651, %v920, 0
        %v927 = vsel %vm711, %v922, 0
        %929 = vmatprep.subr.bf16.mxu0 0
        %930 = vmatpush1.bf16.msra.mxu0 %v927
        %931 = vmatprep.subr.bf16.mxu0 0
        %932 = vmatpush1.bf16.msra.mxu0 0
        %933 = vmatprep.subr.bf16.mxu0 0
        %934 = vmatpush1.bf16.msra.mxu0 0
        %935 = vmatprep.subr.bf16.mxu0 0
        %936 = vmatpush1.bf16.msra.mxu0 0
        %937 = vmatprep.subr.bf16.mxu0 0
        %938 = vmatpush1.bf16.msra.mxu0 0
        %939 = vmatprep.subr.bf16.mxu0 0
        %940 = vmatpush1.bf16.msra.mxu0 0
        %941 = vmatprep.subr.bf16.mxu0 0
        %942 = vmatpush1.bf16.msra.mxu0 0
        %943 = vmatprep.subr.bf16.mxu0 0
        %944 = vmatpush1.bf16.msra.mxu0 0
        %945 = vmatprep.subr.bf16.mxu0 0
        %946 = vmatpush1.bf16.msra.mxu0 0
        %947 = vmatprep.subr.bf16.mxu0 0
        %948 = vmatpush1.bf16.msra.mxu0 0
        %949 = vmatprep.subr.bf16.mxu0 0
        %950 = vmatpush1.bf16.msra.mxu0 0
        %951 = vmatprep.subr.bf16.mxu0 0
        %952 = vmatpush1.bf16.msra.mxu0 0
        %953 = vmatprep.subr.bf16.mxu0 0
        %954 = vmatpush1.bf16.msra.mxu0 0
        %955 = vmatprep.subr.bf16.mxu0 0
        %956 = vmatpush1.bf16.msra.mxu0 0
        %957 = vmatprep.subr.bf16.mxu0 0
        %958 = vmatpush1.bf16.msra.mxu0 0
        %959 = vmatprep.subr.bf16.mxu0 0
        %960 = vmatpush1.bf16.msra.mxu0 0
        %961 = vmatprep.mubr.bf16.mxu0 0
        %962 = vmatmul.mubr.bf16.gmra.mrb[0].mxu0 %v924
        %v963 = vpop.f32.mrb[0].mxu0
        %v964 = vadd.f32 0.0, %v963
        %v965 = vpop.f32.mrb[0].mxu0
        %v966 = vpop.f32.mrb[0].mxu0
        %v967 = vpop.f32.mrb[0].mxu0
        %968 = vdwg.mxu0
        %969 = vrot.lane.b32.xlu0 %v588, 104
        %v970 = vpop.permute.xlu0 %969
        %v972 = vsel %vm651, %v970, 0
        %974 = vmatprep.subr.bf16.mxu0 0
        %975 = vmatpush1.bf16.xpose.msra.mxu0 %v972
        %976 = vmatprep.subr.bf16.mxu0 0
        %977 = vmatpush1.bf16.xpose.msra.mxu0 0
        %978 = vmatprep.subr.bf16.mxu0 0
        %979 = vmatpush1.bf16.xpose.msra.mxu0 0
        %980 = vmatprep.subr.bf16.mxu0 0
        %981 = vmatpush1.bf16.xpose.msra.mxu0 0
        %982 = vmatprep.subr.bf16.mxu0 0
        %983 = vmatpush1.bf16.xpose.msra.mxu0 0
        %984 = vmatprep.subr.bf16.mxu0 0
        %985 = vmatpush1.bf16.xpose.msra.mxu0 0
        %986 = vmatprep.subr.bf16.mxu0 0
        %987 = vmatpush1.bf16.xpose.msra.mxu0 0
        %988 = vmatprep.subr.bf16.mxu0 0
        %989 = vmatpush1.bf16.xpose.msra.mxu0 0
        %990 = vmatprep.subr.bf16.mxu0 0
        %991 = vmatpush1.bf16.xpose.msra.mxu0 0
        %992 = vmatprep.subr.bf16.mxu0 0
        %993 = vmatpush1.bf16.xpose.msra.mxu0 0
        %994 = vmatprep.subr.bf16.mxu0 0
        %995 = vmatpush1.bf16.xpose.msra.mxu0 0
        %996 = vmatprep.subr.bf16.mxu0 0
        %997 = vmatpush1.bf16.xpose.msra.mxu0 0
        %998 = vmatprep.subr.bf16.mxu0 0
        %999 = vmatpush1.bf16.xpose.msra.mxu0 0
        %1000 = vmatprep.subr.bf16.mxu0 0
        %1001 = vmatpush1.bf16.xpose.msra.mxu0 0
        %1002 = vmatprep.subr.bf16.mxu0 0
        %1003 = vmatpush1.bf16.xpose.msra.mxu0 0
        %1004 = vmatprep.subr.bf16.mxu0 0
        %1005 = vmatpush1.bf16.xpose.msra.mxu0 0
        %1006 = vmatprep.mubr.bf16.mxu0 0
        %1007 = vmatmul.mubr.bf16.gmra.mrb[0].mxu0 %v972
        %v1008 = vpop.f32.mrb[0].mxu0
        %v1009 = vadd.f32 0.0, %v1008
        %v1010 = vpop.f32.mrb[0].mxu0
        %v1011 = vpop.f32.mrb[0].mxu0
        %v1012 = vpop.f32.mrb[0].mxu0
        %1013 = vdwg.mxu0
        %v1014 = vsel %vm650, %v1009, -1e+30
        %v1015 = vsel %vm651, %v1014, -inf
        %1016 = vmax.xlane.f32.xlu0 %v1015
        %v1017 = vpop.xlane.xlu0 %1016
        %v1018 = vsub.f32 %v1014, %v1017
        %v1019 = vmul.f32 %v1018, 1.442695
        %v1020 = vpow.pop %v1019
        %v1021 = vsel %vm651, %v1020, 0.0
        %1022 = vadd.xlane.f32.xlu0 %v1021
        %v1023 = vpop.xlane.xlu0 %1022
        %v1024 = vrcp.pop %v1023
        %v1025 = vmul.f32 %v1020, %v1024
        %v1026 = vpack.c.bf16 %v1025, %v1025
        %1027 = vrot.lane.b32.xlu0 %v645, 104
        %v1028 = vpop.permute.xlu0 %1027
        %v1030 = vsel %vm651, %v1026, 0
        %v1033 = vsel %vm711, %v1028, 0
        %1035 = vmatprep.subr.bf16.mxu0 0
        %1036 = vmatpush1.bf16.msra.mxu0 %v1033
        %1037 = vmatprep.subr.bf16.mxu0 0
        %1038 = vmatpush1.bf16.msra.mxu0 0
        %1039 = vmatprep.subr.bf16.mxu0 0
        %1040 = vmatpush1.bf16.msra.mxu0 0
        %1041 = vmatprep.subr.bf16.mxu0 0
        %1042 = vmatpush1.bf16.msra.mxu0 0
        %1043 = vmatprep.subr.bf16.mxu0 0
        %1044 = vmatpush1.bf16.msra.mxu0 0
        %1045 = vmatprep.subr.bf16.mxu0 0
        %1046 = vmatpush1.bf16.msra.mxu0 0
        %1047 = vmatprep.subr.bf16.mxu0 0
        %1048 = vmatpush1.bf16.msra.mxu0 0
        %1049 = vmatprep.subr.bf16.mxu0 0
        %1050 = vmatpush1.bf16.msra.mxu0 0
        %1051 = vmatprep.subr.bf16.mxu0 0
        %1052 = vmatpush1.bf16.msra.mxu0 0
        %1053 = vmatprep.subr.bf16.mxu0 0
        %1054 = vmatpush1.bf16.msra.mxu0 0
        %1055 = vmatprep.subr.bf16.mxu0 0
        %1056 = vmatpush1.bf16.msra.mxu0 0
        %1057 = vmatprep.subr.bf16.mxu0 0
        %1058 = vmatpush1.bf16.msra.mxu0 0
        %1059 = vmatprep.subr.bf16.mxu0 0
        %1060 = vmatpush1.bf16.msra.mxu0 0
        %1061 = vmatprep.subr.bf16.mxu0 0
        %1062 = vmatpush1.bf16.msra.mxu0 0
        %1063 = vmatprep.subr.bf16.mxu0 0
        %1064 = vmatpush1.bf16.msra.mxu0 0
        %1065 = vmatprep.subr.bf16.mxu0 0
        %1066 = vmatpush1.bf16.msra.mxu0 0
        %1067 = vmatprep.mubr.bf16.mxu0 0
        %1068 = vmatmul.mubr.bf16.gmra.mrb[0].mxu0 %v1030
        %v1069 = vpop.f32.mrb[0].mxu0
        %v1070 = vadd.f32 0.0, %v1069
        %v1071 = vpop.f32.mrb[0].mxu0
        %v1072 = vpop.f32.mrb[0].mxu0
        %v1073 = vpop.f32.mrb[0].mxu0
        %1074 = vdwg.mxu0
        %1076 = vrot.lane.b32.xlu0 %v858, 8
        %v1077 = vpop.permute.xlu0 %1076
        %1080 = vrot.lane.b32.xlu0 %v964, 16
        %v1081 = vpop.permute.xlu0 %1080
        %1084 = vrot.lane.b32.xlu0 %v1070, 24
        %v1085 = vpop.permute.xlu0 %1084
        %v1087 = vsel %vm651, %v750, %v1077
        %vm1088 = vcmask 130048
        %v1089 = vsel %vm1088, %v1087, %v1081
        %vm1090 = vcmask 195584
        %v1091 = vsel %vm1090, %v1089, %v1085
        %v1092 = vpack.c.bf16 %v1091, %v1091
        %v1093 = vld [vmem:[#allocation8] sm:$0xf]
        %v1094 = vld [vmem:[#allocation8 + $0x4] sm:$0xf]
        %v1095 = vld [vmem:[#allocation8 + $0x8] sm:$0xf]
        %v1096 = vld [vmem:[#allocation8 + $0xc] sm:$0xf]
        %v1097 = vld [vmem:[%s4] sm:$0x1]
        %v1099 = vlaneseq
        %v1100 = vshrl.u32 %v1099, 7
        %v1101 = vsub.s32 0, %v1100
        %v1102 = vrot.slane %v1097, %v1101
        %v1108 = vunpack.c.l.b16 %v1093
        %v1109 = vunpack.c.l.b16 %v1094
        %v1110 = vunpack.c.l.b16 %v1095
        %v1111 = vunpack.c.l.b16 %v1096
        %v1112 = vpack.c.b16 %v1109, %v1108
        %v1113 = vpack.c.b16 %v1111, %v1110
        %v1117 = vsel %vm544, %v1092, 0
        %1119 = vmatprep.subr.bf16.mxu0 0
        %1120 = vmatpush1.bf16.msra.mxu0 %v1112
        %1121 = vmatprep.subr.bf16.mxu0 0
        %1122 = vmatpush1.bf16.msra.mxu0 %v1113
        %1123 = vmatprep.subr.bf16.mxu0 0
        %1124 = vmatpush1.bf16.msra.mxu0 0
        %1125 = vmatprep.subr.bf16.mxu0 0
        %1126 = vmatpush1.bf16.msra.mxu0 0
        %1127 = vmatprep.subr.bf16.mxu0 0
        %1128 = vmatpush1.bf16.msra.mxu0 0
        %1129 = vmatprep.subr.bf16.mxu0 0
        %1130 = vmatpush1.bf16.msra.mxu0 0
        %1131 = vmatprep.subr.bf16.mxu0 0
        %1132 = vmatpush1.bf16.msra.mxu0 0
        %1133 = vmatprep.subr.bf16.mxu0 0
        %1134 = vmatpush1.bf16.msra.mxu0 0
        %1135 = vmatprep.subr.bf16.mxu0 0
        %1136 = vmatpush1.bf16.msra.mxu0 0
        %1137 = vmatprep.subr.bf16.mxu0 0
        %1138 = vmatpush1.bf16.msra.mxu0 0
        %1139 = vmatprep.subr.bf16.mxu0 0
        %1140 = vmatpush1.bf16.msra.mxu0 0
        %1141 = vmatprep.subr.bf16.mxu0 0
        %1142 = vmatpush1.bf16.msra.mxu0 0
        %1143 = vmatprep.subr.bf16.mxu0 0
        %1144 = vmatpush1.bf16.msra.mxu0 0
        %1145 = vmatprep.subr.bf16.mxu0 0
        %1146 = vmatpush1.bf16.msra.mxu0 0
        %1147 = vmatprep.subr.bf16.mxu0 0
        %1148 = vmatpush1.bf16.msra.mxu0 0
        %1149 = vmatprep.subr.bf16.mxu0 0
        %1150 = vmatpush1.bf16.msra.mxu0 0
        %1151 = vmatprep.mubr.bf16.mxu0 0
        %1152 = vmatmul.mubr.bf16.gmra.mrb[0].mxu0 %v1117
        %v1153 = vpop.f32.mrb[0].mxu0
        %v1154 = vadd.f32 %v1102, %v1153
        %v1155 = vpop.f32.mrb[0].mxu0
        %v1156 = vpop.f32.mrb[0].mxu0
        %v1157 = vpop.f32.mrb[0].mxu0
        %1158 = vdwg.mxu0
        %v1159 = vadd.f32 %v1154, %v526
        %v1160 = vld [vmem:[%s5] sm:$0x1]
        %v1161 = vld [vmem:[#allocation10] sm:$0x1]
        %v1162 = vsel %vm544, %v1159, 0.0
        %1163 = vadd.xlane.f32.xlu0 %v1162
        %v1164 = vpop.xlane.xlu0 %1163
        %v1165 = vrcp.pop 32.0
        %v1166 = vmul.f32 %v1164, %v1165
        %v1167 = vsub.f32 %v1159, %v1166
        %v1168 = vmul.f32 %v1167, %v1167
        %v1169 = vsel %vm544, %v1168, 0.0
        %1170 = vadd.xlane.f32.xlu0 %v1169
        %v1171 = vpop.xlane.xlu0 %1170
        %v1172 = vmul.f32 %v1171, %v1165
        %v1173 = vadd.f32 %v1172, 1e-05
        %v1174 = vrsqrt.pop %v1173
        %v1175 = vmul.f32 %v1167, %v1174
        %v1177 = vlaneseq
        %v1178 = vshrl.u32 %v1177, 7
        %v1179 = vsub.s32 0, %v1178
        %v1180 = vrot.slane %v1160, %v1179
        %v1182 = vmul.f32 %v1175, %v1180
        %v1184 = vlaneseq
        %v1185 = vshrl.u32 %v1184, 7
        %v1186 = vsub.s32 0, %v1185
        %v1187 = vrot.slane %v1161, %v1186
        %v1189 = vadd.f32 %v1182, %v1187
        %v1190 = vpack.c.bf16 %v1189, %v1189
        %v1191 = vld [vmem:[%s7] sm:$0xf]
        %v1192 = vld [vmem:[%s7 + $0x4] sm:$0xf]
        %v1193 = vld [vmem:[%s7 + $0x8] sm:$0xf]
        %v1194 = vld [vmem:[%s7 + $0xc] sm:$0xf]
        %v1195 = vld [vmem:[#allocation11] sm:$0x1]
        %v1197 = vlaneseq
        %v1198 = vshrl.u32 %v1197, 7
        %v1199 = vsub.s32 0, %v1198
        %v1200 = vrot.slane %v1195, %v1199
        %v1206 = vunpack.c.l.b16 %v1191
        %v1207 = vunpack.c.l.b16 %v1192
        %v1208 = vunpack.c.l.b16 %v1193
        %v1209 = vunpack.c.l.b16 %v1194
        %v1210 = vpack.c.b16 %v1207, %v1206
        %v1211 = vpack.c.b16 %v1209, %v1208
        %v1215 = vsel %vm544, %v1190, 0
        %1217 = vmatprep.subr.bf16.mxu0 0
        %1218 = vmatpush1.bf16.msra.mxu0 %v1210
        %1219 = vmatprep.subr.bf16.mxu0 0
        %1220 = vmatpush1.bf16.msra.mxu0 %v1211
        %1221 = vmatprep.subr.bf16.mxu0 0
        %1222 = vmatpush1.bf16.msra.mxu0 0
        %1223 = vmatprep.subr.bf16.mxu0 0
        %1224 = vmatpush1.bf16.msra.mxu0 0
        %1225 = vmatprep.subr.bf16.mxu0 0
        %1226 = vmatpush1.bf16.msra.mxu0 0
        %1227 = vmatprep.subr.bf16.mxu0 0
        %1228 = vmatpush1.bf16.msra.mxu0 0
        %1229 = vmatprep.subr.bf16.mxu0 0
        %1230 = vmatpush1.bf16.msra.mxu0 0
        %1231 = vmatprep.subr.bf16.mxu0 0
        %1232 = vmatpush1.bf16.msra.mxu0 0
        %1233 = vmatprep.subr.bf16.mxu0 0
        %1234 = vmatpush1.bf16.msra.mxu0 0
        %1235 = vmatprep.subr.bf16.mxu0 0
        %1236 = vmatpush1.bf16.msra.mxu0 0
        %1237 = vmatprep.subr.bf16.mxu0 0
        %1238 = vmatpush1.bf16.msra.mxu0 0
        %1239 = vmatprep.subr.bf16.mxu0 0
        %1240 = vmatpush1.bf16.msra.mxu0 0
        %1241 = vmatprep.subr.bf16.mxu0 0
        %1242 = vmatpush1.bf16.msra.mxu0 0
        %1243 = vmatprep.subr.bf16.mxu0 0
        %1244 = vmatpush1.bf16.msra.mxu0 0
        %1245 = vmatprep.subr.bf16.mxu0 0
        %1246 = vmatpush1.bf16.msra.mxu0 0
        %1247 = vmatprep.subr.bf16.mxu0 0
        %1248 = vmatpush1.bf16.msra.mxu0 0
        %1249 = vmatprep.mubr.bf16.mxu0 0
        %1250 = vmatmul.mubr.bf16.gmra.mrb[0].mxu0 %v1215
        %v1251 = vpop.f32.mrb[0].mxu0
        %v1252 = vadd.f32 %v1200, %v1251
        %v1253 = vpop.f32.mrb[0].mxu0
        %v1254 = vpop.f32.mrb[0].mxu0
        %v1255 = vpop.f32.mrb[0].mxu0
        %1256 = vdwg.mxu0
        %v1257 = vmax.f32 %v1252, 0.0
        %v1258 = vpack.c.bf16 %v1257, %v1257
        %v1259 = vld [vmem:[%s9] sm:$0xf]
        %v1260 = vld [vmem:[%s9 + $0x4] sm:$0xf]
        %v1261 = vld [vmem:[%s9 + $0x8] sm:$0xf]
        %v1262 = vld [vmem:[%s9 + $0xc] sm:$0xf]
        %v1263 = vld [vmem:[%s10] sm:$0x1]
        %v1265 = vlaneseq
        %v1266 = vshrl.u32 %v1265, 7
        %v1267 = vsub.s32 0, %v1266
        %v1268 = vrot.slane %v1263, %v1267
        %v1274 = vunpack.c.l.b16 %v1259
        %v1275 = vunpack.c.l.b16 %v1260
        %v1276 = vunpack.c.l.b16 %v1261
        %v1277 = vunpack.c.l.b16 %v1262
        %v1278 = vpack.c.b16 %v1275, %v1274
        %v1279 = vpack.c.b16 %v1277, %v1276
        %v1283 = vsel %vm544, %v1258, 0
        %1285 = vmatprep.subr.bf16.mxu0 0
        %1286 = vmatpush1.bf16.msra.mxu0 %v1278
        %1287 = vmatprep.subr.bf16.mxu0 0
        %1288 = vmatpush1.bf16.msra.mxu0 %v1279
        %1289 = vmatprep.subr.bf16.mxu0 0
        %1290 = vmatpush1.bf16.msra.mxu0 0
        %1291 = vmatprep.subr.bf16.mxu0 0
        %1292 = vmatpush1.bf16.msra.mxu0 0
        %1293 = vmatprep.subr.bf16.mxu0 0
        %1294 = vmatpush1.bf16.msra.mxu0 0
        %1295 = vmatprep.subr.bf16.mxu0 0
        %1296 = vmatpush1.bf16.msra.mxu0 0
        %1297 = vmatprep.subr.bf16.mxu0 0
        %1298 = vmatpush1.bf16.msra.mxu0 0
        %1299 = vmatprep.subr.bf16.mxu0 0
        %1300 = vmatpush1.bf16.msra.mxu0 0
        %1301 = vmatprep.subr.bf16.mxu0 0
        %1302 = vmatpush1.bf16.msra.mxu0 0
        %1303 = vmatprep.subr.bf16.mxu0 0
        %1304 = vmatpush1.bf16.msra.mxu0 0
        %1305 = vmatprep.subr.bf16.mxu0 0
        %1306 = vmatpush1.bf16.msra.mxu0 0
        %1307 = vmatprep.subr.bf16.mxu0 0
        %1308 = vmatpush1.bf16.msra.mxu0 0
        %1309 = vmatprep.subr.bf16.mxu0 0
        %1310 = vmatpush1.bf16.msra.mxu0 0
        %1311 = vmatprep.subr.bf16.mxu0 0
        %1312 = vmatpush1.bf16.msra.mxu0 0
        %1313 = vmatprep.subr.bf16.mxu0 0
        %1314 = vmatpush1.bf16.msra.mxu0 0
        %1315 = vmatprep.subr.bf16.mxu0 0
        %1316 = vmatpush1.bf16.msra.mxu0 0
        %1317 = vmatprep.mubr.bf16.mxu0 0
        %1318 = vmatmul.mubr.bf16.gmra.mrb[0].mxu0 %v1283
        %v1319 = vpop.f32.mrb[0].mxu0
        %v1320 = vadd.f32 %v1268, %v1319
        %v1321 = vpop.f32.mrb[0].mxu0
        %v1322 = vpop.f32.mrb[0].mxu0
        %v1323 = vpop.f32.mrb[0].mxu0
        %1324 = vdwg.mxu0
        %v1325 = vadd.f32 %v1320, %v1189
        %v1326 = vadd.f32 %v1325, %v526
        %v1327 = vld [vmem:[%s11] sm:$0x1]
        %v1328 = vld [vmem:[%s12] sm:$0x1]
        %v1329 = vsel %vm544, %v1326, 0.0
        %1330 = vadd.xlane.f32.xlu0 %v1329
        %v1331 = vpop.xlane.xlu0 %1330
        %v1332 = vmul.f32 %v1331, %v1165
        %v1333 = vsub.f32 %v1326, %v1332
        %v1334 = vmul.f32 %v1333, %v1333
        %v1335 = vsel %vm544, %v1334, 0.0
        %1336 = vadd.xlane.f32.xlu0 %v1335
        %v1337 = vpop.xlane.xlu0 %1336
        %v1338 = vmul.f32 %v1337, %v1165
        %v1339 = vadd.f32 %v1338, 1e-05
        %v1340 = vrsqrt.pop %v1339
        %v1341 = vmul.f32 %v1333, %v1340
        %v1343 = vlaneseq
        %v1344 = vshrl.u32 %v1343, 7
        %v1345 = vsub.s32 0, %v1344
        %v1346 = vrot.slane %v1327, %v1345
        %v1348 = vmul.f32 %v1341, %v1346
        %v1350 = vlaneseq
        %v1351 = vshrl.u32 %v1350, 7
        %v1352 = vsub.s32 0, %v1351
        %v1353 = vrot.slane %v1328, %v1352
        %v1355 = vadd.f32 %v1348, %v1353
        %1356 = vst.msk [vmem:[%s524] sm:$0xff] %vm544, %v1355
        %s1357 = sand.u32 %s319, 1
        %s1358 = scalar_lea.sflag [#allocation4], %s1357
        %s1359 = sand.u32 %s319, 1
        %s1360 = smul.addr %s1359, 8
        %s1361 = scalar_lea.vmem [#allocation13], %s1360
        // Predicated region
        $region97: #{tpu_custom_call.1} parent=71 // pred_check
          %p1362 = pneg %p329
        $region98: #{tpu_custom_call.1} parent=71 // pred_check_branch
          %1364 = sbr.rel (%p1362) target = $region100
        $region99: #{tpu_custom_call.1} parent=71 // pred_region
          %s1366 = ssub.s32 128, 128
          %1367 = vsyncadd %s1358, %s1366
          %s1368 = smul.addr %s33, 128
          %s1369 = scalar_lea.hbm %s13, %s1368
          %s1371 = sshll.u32 %s1361, 4
          %s1372 = int_to_ptr.vmem [resolvable:$true] %s1371
          %1374 = dma.vmem_to_hbm [thread:$0]  %s1372, 128, %s1369, %s1358
        $region100: #{tpu_custom_call.1} parent=71 // pred_fallthru
          _
      $region72: #{tpu_custom_call.1} parent=5 // pred_fallthru
        _
      %p1375 = scmp.le.s32.totalorder 2, %s28
      // Predicated region
      $region101: #{tpu_custom_call.1} parent=5 // pred_check
        %p1376 = pneg %p1375
      $region102: #{tpu_custom_call.1} parent=5 // pred_check_branch
        %1378 = sbr.rel (%p1376) target = $region104
      $region103: #{tpu_custom_call.1} parent=5 // pred_region
        %s1379 = ssub.s32 %s28, 2
        // Predicated region
        $region105: #{tpu_custom_call.1} parent=103 // pred_check
          %p1380 = pneg %p335
        $region106: #{tpu_custom_call.1} parent=103 // pred_check_branch
          %1382 = sbr.rel (%p1380) target = $region108
        $region107: #{tpu_custom_call.1} parent=103 // pred_region
          %s1383 = sand.u32 %s320, 1
          %s1384 = scalar_lea.sflag [#allocation4], %s1383
          %s1385 = sand.u32 %s320, 1
          %s1386 = smul.addr %s1385, 8
          %s1387 = scalar_lea.vmem [#allocation13], %s1386
          %1388 = dma.done %s1384, 128
        $region108: #{tpu_custom_call.1} parent=103 // pred_fallthru
          _
      $region104: #{tpu_custom_call.1} parent=5 // pred_fallthru
        _
    $region6: #{tpu_custom_call.1} parent=1 // loop_footer
      %s32 = sadd.s32 1, %s28
    $region7: #{tpu_custom_call.1} parent=1 // loop_footer_branch
      %27 = sbr.rel target = $region3
    $region8: #{tpu_custom_call.1} parent=1 // loop_exit
      _
    %1389 = vsyncpa [#allocation3], 1
    %s1390 = scalar_lea.sflag [#allocation3], 1
    %1391 = vsyncpa %s1390, 1
    %1392 = vsyncpa [#allocation6], 1
    %1393 = vsyncpa [#allocation9], 1
    %1394 = vsyncpa [#allocation12], 1
    %1395 = vsyncpa [#allocation4], 1
    %s1396 = scalar_lea.sflag [#allocation4], 1
    %1397 = vsyncpa %s1396, 1

</llo_original>
